<compile_context>
chip_gen: v7x
topology: tpu7x:2x2x1
jax: 0.10.0
libtpu: 0.0.40
codegen_flags: <defaults>
</compile_context>

<pallas_src>
import functools

import jax
import jax.numpy as jnp
import numpy as np
from jax.experimental import pallas as pl
from jax.experimental.pallas import tpu as pltpu

FFTSIZE = 512            # the reference's liftering masks hard-code 512 / 256
WINDOW_SIZE = 64
STRIDE = 32
N_CO = 29
F = FFTSIZE // 2 + 1     # 257 rfft bins
PAD_F = 384              # re/im split position in the first matmul output (3*128 lanes)
OUT_W = 640              # packed output width: vt @ [0,257), ex @ [257,514), 5*128 lanes

assert WINDOW_SIZE == 2 * STRIDE  # required by the reshape+concat framing below


def _round_up(a, b):
    return ((a + b - 1) // b) * b


@functools.lru_cache(maxsize=None)
def _build_constants_f64():
    """Fused constant matrices, built once in float64 on the host.

    c1 (W, 2*PAD_F):   [ diag(hamming) @ cos_dft | -diag(hamming) @ sin_dft ], each half
                       zero-padded from F=257 to PAD_F=384 lanes so the in-kernel re/im
                       split is 128-lane aligned.
    d2 (PAD_F, OUT_W): [ dinv@diag(m_vt)@dfwd | dinv@diag(m_ex)@dfwd ], i.e. irfft ->
                       cepstral liftering -> real(rfft) folded into one (257,257) matrix
                       per output, packed at columns 0 and 257.  Rows 257..383 are zero
                       so the padded log-spectrum lanes cannot contaminate the result.
    """
    win = np.hamming(WINDOW_SIZE).astype(np.float64)

    # rfft of a zero-padded length-W real frame, window folded in.
    m = np.arange(WINDOW_SIZE, dtype=np.float64)[:, None]
    k = np.arange(F, dtype=np.float64)[None, :]
    ang = 2.0 * np.pi * m * k / FFTSIZE
    c1 = np.zeros((WINDOW_SIZE, 2 * PAD_F), np.float64)
    c1[:, :F] = np.cos(ang) * win[:, None]
    c1[:, PAD_F:PAD_F + F] = -np.sin(ang) * win[:, None]

    # irfft of a real length-F half-spectrum L:  cep = L @ dinv      (dinv: (F, N))
    n = np.arange(FFTSIZE, dtype=np.float64)[None, :]
    kk = np.arange(F, dtype=np.float64)[:, None]
    wk = np.full((F, 1), 2.0)
    wk[0, 0] = 1.0
    wk[-1, 0] = 1.0
    dinv = wk * np.cos(2.0 * np.pi * kk * n / FFTSIZE) / FFTSIZE

    # real(rfft(c, n=N)) = c @ dfwd                                  (dfwd: (N, F))
    nn = np.arange(FFTSIZE, dtype=np.float64)[:, None]
    kf = np.arange(F, dtype=np.float64)[None, :]
    dfwd = np.cos(2.0 * np.pi * nn * kf / FFTSIZE)

    # Cepstral liftering masks, exactly as the reference loop writes them.
    q = np.arange(FFTSIZE)
    mask_le = ((q < N_CO) | (q >= FFTSIZE - N_CO)).astype(np.float64)
    mask_mp = np.where(q == 0, 1.0, np.where(q < FFTSIZE // 2, 2.0, 0.0))
    m_vt = mask_le * mask_mp
    m_ex = (1.0 - mask_le) * mask_mp

    d2 = np.zeros((PAD_F, OUT_W), np.float64)
    d2[:F, :F] = (dinv * m_vt[None, :]) @ dfwd
    d2[:F, F:2 * F] = (dinv * m_ex[None, :]) @ dfwd
    # Note: m_vt has only 29 active quefrency taps -> the vt matrix is rank-29; the
    # factored form would cut matmul-2 FLOPs ~16% but is low priority (see review).
    return c1, d2


@functools.lru_cache(maxsize=None)
def _build_constants(precision="bf16"):
    c1, d2 = _build_constants_f64()
    if precision == "f32":
        c1_dt = d2_dt = jnp.float32
    elif precision == "mixed":      # bf16 frames/DFT, f32 second (dominant) matmul
        c1_dt, d2_dt = jnp.bfloat16, jnp.float32
    elif precision == "bf16":
        c1_dt = d2_dt = jnp.bfloat16
    else:
        raise ValueError(f"unknown precision: {precision!r}")
    return jnp.asarray(c1, c1_dt), jnp.asarray(d2, d2_dt)


def stc_kernel(frames_ref, c1_ref, d2_ref, out_ref):
    # MXU push 1: windowed, zero-padded real DFT -> [re | im] (each PAD_F lanes wide).
    y = jnp.dot(frames_ref[...], c1_ref[...], preferred_element_type=jnp.float32)
    re = y[:, :PAD_F]
    im = y[:, PAD_F:]
    # Reference-exact log-magnitude.  sqrt/log/exp ride the EUP slot, which is not the
    # bottleneck here (MXU + output stores are), so restoring the sqrt is ~free.
    log_abs = jnp.log(jnp.sqrt(re * re + im * im) + 1e-20)
    # MXU push 2: fused irfft -> liftering masks -> real(rfft), both outputs at once.
    z = jnp.dot(log_abs.astype(d2_ref.dtype), d2_ref[...],
                preferred_element_type=jnp.float32)
    # Lane-dense (tm, 640) store: cols [0,257) = vocal tract, [257,514) = excitation.
    out_ref[...] = jnp.exp(z).astype(out_ref.dtype)


def _choose_tile(M, tm_max):
    """Row tile: multiple of 16 (safe for bf16 sublane packing), capped at tm_max, and
    chosen so the 1-D grid has an EVEN number of steps whenever there is enough work,
    so both v7x TensorCores stay busy (no effect on single-TC v5e/v6e)."""
    tm_max = max(16, (tm_max // 16) * 16)
    n_steps = -(-M // tm_max)
    if n_steps % 2 == 1 and M >= 32:
        n_steps += 1
    return min(tm_max, _round_up(-(-M // n_steps), 16))


def _stc_forward(x, c1, d2, *, tm, out_dtype):
    B, C, T = x.shape
    num_frames = (T - WINDOW_SIZE) // STRIDE + 1
    M = B * C * num_frames

    # Framing (torch.unfold(-1, 64, 32)) as reshape + concat of adjacent 32-sample
    # chunks: plain strided slices/copies instead of an XLA gather over an index tensor.
    t_used = (num_frames + 1) * STRIDE
    chunks = x[..., :t_used].reshape(B, C, num_frames + 1, STRIDE)
    frames = jnp.concatenate([chunks[:, :, :-1, :], chunks[:, :, 1:, :]], axis=-1)
    frames = frames.reshape(M, WINDOW_SIZE).astype(c1.dtype)

    tm_eff = _choose_tile(M, tm)
    Mp = _round_up(M, tm_eff)
    if Mp != M:
        frames = jnp.pad(frames, ((0, Mp - M), (0, 0)))

    out = pl.pallas_call(
        stc_kernel,
        out_shape=jax.ShapeDtypeStruct((Mp, OUT_W), out_dtype),
        grid=(Mp // tm_eff,),
        in_specs=[
            pl.BlockSpec((tm_eff, WINDOW_SIZE), lambda i: (i, 0)),
            # Constant operands: block index never changes, so the pipeline does not
            # re-DMA them per step.  (pl.Buffered(1) would shave ~0.6-1.3 MiB of VMEM,
            # but the budget below has >15 MiB headroom, so it is not taken.)
            pl.BlockSpec((WINDOW_SIZE, 2 * PAD_F), lambda i: (0, 0)),
            pl.BlockSpec((PAD_F, OUT_W), lambda i: (0, 0)),
        ],
        out_specs=pl.BlockSpec((tm_eff, OUT_W), lambda i: (i, 0)),
        compiler_params=pltpu.CompilerParams(
            dimension_semantics=("parallel",),
            # VMEM budget at tm=2048 (bf16 operands, f32 out): 2x(tm,640)f32 out tiles
            # ~10 MiB + 2x(tm,64)bf16 frame tiles ~0.5 MiB + constants ~1.2 MiB +
            # in-kernel f32 intermediates (y / log_abs / z) ~15 MiB  =>  ~27 MiB,
            # comfortably under the 48 MiB scoped limit and v7x's 64 MiB physical VMEM.
            vmem_limit_bytes=48 * 1024 * 1024),
    )(frames, c1, d2)

    vt = out[:M, :F].reshape(B, C, num_frames, F).transpose(0, 1, 3, 2)
    ex = out[:M, F:2 * F].reshape(B, C, num_frames, F).transpose(0, 1, 3, 2)
    return vt, ex


_stc_forward_jit = jax.jit(_stc_forward, static_argnames=("tm", "out_dtype"))


def short_time_cepstrum(x, *, precision="bf16", tm=2048, out_dtype=jnp.float32):
    """x: [B, C, T] -> (vocal_tract, excitation), each [B, C, 257, num_frames].

    precision: "bf16"  (default; 2-3x MXU throughput, ~1e-3..1e-2 relative error),
               "mixed" (bf16 frames/DFT, f32 liftering matmul),
               "f32"   (reference numerics; f32 matmuls are multi-pass on the MXU).
    tm:        max row tile (sweep 1024/2048 at large M; capped for v7x VMEM).
    out_dtype: jnp.float32 (reference parity) or jnp.bfloat16 to halve the output write.
    """
    c1, d2 = _build_constants(precision)
    return _stc_forward_jit(x, c1, d2, tm=tm, out_dtype=out_dtype)


# ----------------------------- host-side references -----------------------------

def _numpy_reference(x):
    """float64 NumPy transcription of the PyTorch module's forward (ground truth)."""
    x = np.asarray(x, np.float64)
    B, C, T = x.shape
    nf = (T - WINDOW_SIZE) // STRIDE + 1
    idx = np.arange(nf)[:, None] * STRIDE + np.arange(WINDOW_SIZE)[None, :]
    frames = x[..., idx] * np.hamming(WINDOW_SIZE)
    spec = np.fft.rfft(frames, n=FFTSIZE, axis=-1)
    log_abs = np.log(np.abs(spec) + 1e-20)
    cep = np.fft.irfft(log_abs, n=FFTSIZE, axis=-1)
    q = np.arange(FFTSIZE)
    mask_le = ((q < N_CO) | (q >= FFTSIZE - N_CO)).astype(np.float64)
    mask_mp = np.where(q == 0, 1.0, np.where(q < FFTSIZE // 2, 2.0, 0.0))
    vt = np.exp(np.real(np.fft.rfft(cep * (mask_le * mask_mp), n=FFTSIZE, axis=-1)))
    ex = np.exp(np.real(np.fft.rfft(cep * ((1.0 - mask_le) * mask_mp), n=FFTSIZE, axis=-1)))
    return vt.transpose(0, 1, 3, 2), ex.transpose(0, 1, 3, 2)


def _numpy_folded(x):
    """The kernel's folded-matrix algorithm in float64 (algebra self-check)."""
    c1, d2 = _build_constants_f64()
    x = np.asarray(x, np.float64)
    B, C, T = x.shape
    nf = (T - WINDOW_SIZE) // STRIDE + 1
    idx = np.arange(nf)[:, None] * STRIDE + np.arange(WINDOW_SIZE)[None, :]
    frames = x[..., idx].reshape(-1, WINDOW_SIZE)
    y = frames @ c1
    re, im = y[:, :PAD_F], y[:, PAD_F:]
    out = np.exp(np.log(np.sqrt(re * re + im * im) + 1e-20) @ d2)
    vt = out[:, :F].reshape(B, C, nf, F).transpose(0, 1, 3, 2)
    ex = out[:, F:2 * F].reshape(B, C, nf, F).transpose(0, 1, 3, 2)
    return vt, ex


if __name__ == "__main__":
    key = jax.random.PRNGKey(0)
    # [B, C, T] = [2, 2, 288] -> 8 frames of 64 samples at stride 32 per channel.
    x = jax.random.normal(key, (2, 2, 288), dtype=jnp.float32)
    B, C, T = x.shape
    nf = (T - WINDOW_SIZE) // STRIDE + 1

    x_np = np.asarray(x)
    vt_ref, ex_ref = _numpy_reference(x_np)

    # 1) float64 algebra self-check: folded constant matrices == FFT-based reference.
    vt_fold, ex_fold = _numpy_folded(x_np)
    assert np.max(np.abs(np.log(vt_fold) - np.log(vt_ref))) < 1e-6
    assert np.max(np.abs(np.log(ex_fold) - np.log(ex_ref))) < 1e-6

    # 2) Default (bf16-operand) TPU kernel: shape / dtype / finiteness.
    vt, ex = short_time_cepstrum(x)
    jax.block_until_ready((vt, ex))
    assert vt.shape == (B, C, F, nf), vt.shape
    assert ex.shape == (B, C, F, nf), ex.shape
    assert vt.dtype == jnp.float32 and ex.dtype == jnp.float32
    assert bool(jnp.all(jnp.isfinite(vt))) and bool(jnp.all(jnp.isfinite(ex)))

    # 3) Reference-precision (f32) TPU kernel vs the float64 reference, compared in the
    #    log domain so exp() does not inflate the tolerance; structural bugs show up as
    #    O(1)+ log-domain errors, MXU precision noise is orders of magnitude below 1.5.
    vt32, ex32 = short_time_cepstrum(x, precision="f32")
    jax.block_until_ready((vt32, ex32))
    dvt = np.max(np.abs(np.log(np.maximum(np.asarray(vt32, np.float64), 1e-30))
                        - np.log(vt_ref)))
    dex = np.max(np.abs(np.log(np.maximum(np.asarray(ex32, np.float64), 1e-30))
                        - np.log(ex_ref)))
    assert dvt < 1.5 and dex < 1.5, (dvt, dex)

    print("KERNEL_OK")
</pallas_src>

<mosaic_0001>
module attributes {stable_mosaic.version = 11 : i64} {
  func.func @stc_kernel(%arg0: i32, %arg1: memref<16x64xbf16, #tpu.memory_space<vmem>>, %arg2: memref<64x768xbf16, #tpu.memory_space<vmem>>, %arg3: memref<384x640xbf16, #tpu.memory_space<vmem>>, %arg4: memref<16x640xf32, #tpu.memory_space<vmem>>) attributes {dimension_semantics = [#tpu.dimension_semantics<parallel>], iteration_bounds = array<i64: 2>, scalar_prefetch = 0 : i64, scratch_operands = 0 : i64, tpu.core_type = #tpu.core_type<tc>, window_params = [{transform_indices = @transform_0, window_bounds = array<i64: 16, 64>}, {pipeline_mode = #tpu.pipeline_mode<synchronous>, transform_indices = @transform_1, window_bounds = array<i64: 64, 768>}, {pipeline_mode = #tpu.pipeline_mode<synchronous>, transform_indices = @transform_2, window_bounds = array<i64: 384, 640>}, {transform_indices = @transform_3, window_bounds = array<i64: 16, 640>}]} {
    %c0 = arith.constant 0 : index
    %c0_0 = arith.constant 0 : index
    %0 = vector.load %arg1[%c0, %c0_0] : memref<16x64xbf16, #tpu.memory_space<vmem>>, vector<16x64xbf16>
    %c0_1 = arith.constant 0 : index
    %c0_2 = arith.constant 0 : index
    %1 = vector.load %arg2[%c0_1, %c0_2] : memref<64x768xbf16, #tpu.memory_space<vmem>>, vector<64x768xbf16>
    %cst = arith.constant dense<0.000000e+00> : vector<16x768xf32>
    %2 = tpu.matmul %0, %1, %cst {dimension_numbers = #tpu.dot_dimension_numbers<[1], [0], [0], [1], [0, 0, 1, 1], [], []>} : vector<16x64xbf16>, vector<64x768xbf16>, vector<16x768xf32> -> vector<16x768xf32>
    %3 = vector.extract_strided_slice %2 {offsets = [0, 0], sizes = [16, 384], strides = [1, 1]} : vector<16x768xf32> to vector<16x384xf32>
    %4 = vector.extract_strided_slice %2 {offsets = [0, 384], sizes = [16, 384], strides = [1, 1]} : vector<16x768xf32> to vector<16x384xf32>
    %5 = arith.mulf %3, %3 : vector<16x384xf32>
    %6 = arith.mulf %4, %4 : vector<16x384xf32>
    %7 = arith.addf %5, %6 : vector<16x384xf32>
    %8 = math.sqrt %7 : vector<16x384xf32>
    %cst_3 = arith.constant 9.99999968E-21 : f32
    %9 = vector.broadcast %cst_3 : f32 to vector<16x384xf32>
    %10 = arith.addf %8, %9 : vector<16x384xf32>
    %11 = math.log %10 : vector<16x384xf32>
    %12 = arith.truncf %11 : vector<16x384xf32> to vector<16x384xbf16>
    %c0_4 = arith.constant 0 : index
    %c0_5 = arith.constant 0 : index
    %13 = vector.load %arg3[%c0_4, %c0_5] : memref<384x640xbf16, #tpu.memory_space<vmem>>, vector<384x640xbf16>
    %cst_6 = arith.constant dense<0.000000e+00> : vector<16x640xf32>
    %14 = tpu.matmul %12, %13, %cst_6 {dimension_numbers = #tpu.dot_dimension_numbers<[1], [0], [0], [1], [0, 0, 1, 1], [], []>} : vector<16x384xbf16>, vector<384x640xbf16>, vector<16x640xf32> -> vector<16x640xf32>
    %15 = math.exp %14 : vector<16x640xf32>
    %c0_7 = arith.constant 0 : index
    %c0_8 = arith.constant 0 : index
    %16 = vector.load %arg4[%c0_7, %c0_8] : memref<16x640xf32, #tpu.memory_space<vmem>>, vector<16x640xf32>
    tpu.vector_store %arg4[%c0_7, %c0_8], %15 {strides = array<i32>} : memref<16x640xf32, #tpu.memory_space<vmem>>, vector<16x640xf32>,
    return
  }
  func.func @transform_0(%arg0: i32) -> (i32, i32) {
    %c0_i32 = arith.constant 0 : i32
    %c0_i32_0 = arith.constant 0 : i32
    return %arg0, %c0_i32 : i32, i32
  }
  func.func @transform_1(%arg0: i32) -> (i32, i32) {
    %c0_i32 = arith.constant 0 : i32
    %c0_i32_0 = arith.constant 0 : i32
    %c0_i32_1 = arith.constant 0 : i32
    return %c0_i32, %c0_i32_0 : i32, i32
  }
  func.func @transform_2(%arg0: i32) -> (i32, i32) {
    %c0_i32 = arith.constant 0 : i32
    %c0_i32_0 = arith.constant 0 : i32
    %c0_i32_1 = arith.constant 0 : i32
    return %c0_i32, %c0_i32_0 : i32, i32
  }
  func.func @transform_3(%arg0: i32) -> (i32, i32) {
    %c0_i32 = arith.constant 0 : i32
    %c0_i32_0 = arith.constant 0 : i32
    return %arg0, %c0_i32 : i32, i32
  }
}

</mosaic_0001>

<llo_original>
// kernel: _stc_forward.1
$region0: #{_stc_forward.1}
  #allocation0 [shape = 'u32[]', space=smem, size = 0x4, offset = 0x4, fixed_abs, tag = 'smem constant byte address 0x4 - core index']
  #allocation1 [shape = 'u32[144,128]{1,0:T(1,128)}', space=vmem, size = 0x12000, scoped, tag = 'internal scratch']
  %s0 = inlined_call_operand.vmem [shape: bf16[32,64], index: 0, kind: input, shape index: {}]
  %s1 = inlined_call_operand.hbm [shape: bf16[64,768], index: 1, kind: input, shape index: {}]
  %s2 = inlined_call_operand.hbm [shape: bf16[384,640], index: 2, kind: input, shape index: {}]
  %s3 = inlined_call_operand.vmem [shape: f32[32,640], index: 3, kind: output, shape index: {}]
  %s4 = sld [smem:[#allocation0]]
  $region53: #{_stc_forward.1} parent=0
    _
  %s6 = ssub.s32 1, %s4
  %s7 = scalar_select 0, %s6, %s4
  $region1: #{_stc_forward.1} parent=0
    #allocation2 [shape = 'u8[98304]{0}', space=vmem, size = 0x18000, scoped, tag = 'input window, operand 1, single buffered']
    #allocation3 [shape = 's32[2]{0}', space=sflag, size = 0x8, scoped, tag = 'scoped memory for _stc_forward.1']
    #allocation4 [shape = 'u8[491520]{0}', space=vmem, size = 0x78000, scoped, tag = 'input window, operand 2, single buffered']
    #allocation5 [shape = 's32[1]{0}', space=sflag, size = 0x4, scoped, tag = 'scoped memory for _stc_forward.1']
    %8 = vsyncpa [#allocation3], 0
    %9 = vsyncpa [#allocation5], 0
    loop: start=0, step=1, limit=4
    $region2: #{_stc_forward.1} parent=1 // loop_pre_header
      _
    $region3: #{_stc_forward.1} parent=1 // loop_header
      %s11 = sphi 0, %s15
      %p12 = scmp.ge.s32.totalorder %s11, 4
      %s21 = sphi 0, %s23
      %s24 = sphi 0, %s21
      %s25 = sphi 0, %s24
      %s41 = sphi 0, %s25
      %s45 = sphi 0, %s45
      %s47 = sphi 0, %s45
      %s48 = sphi 0, %s47
      %s62 = sphi 0, %s48
      %s66 = sphi 0, %s66
      %s68 = sphi 0, %s66
      %s69 = sphi 0, %s68
      %s83 = sphi 0, %s69
      %s89 = sphi 0, %s91
      %s92 = sphi 0, %s89
      %s93 = sphi 0, %s92
      %s109 = sphi 0, %s93
    $region4: #{_stc_forward.1} parent=1 // loop_header_branch
      %14 = sbr.rel (%p12) target = $region8
    $region5: #{_stc_forward.1} parent=1 // loop_body
      %s16 = ssub.s32 %s11, 1
      %s17 = ssub.s32 %s11, 2
      %s18 = sadd.s32 %s11, 1
      %s19 = ssub.s32 %s11, %s18
      %p20 = scmp.eq.s32.totalorder %s19, 0
      %s22 = sadd.s32 %s21, 1
      %s23 = scalar_select %p20, %s21, %s22
      %p26 = pneg %p20
      %p27 = scmp.eq.s32.totalorder %s11, 1
      %p28 = por %p26, %p27
      %p29 = scmp.ne.s32.totalorder %s21, %s24
      %p30 = scmp.eq.s32.totalorder %s11, 0
      %p31 = por %p29, %p30
      %p32 = scmp.ne.s32.totalorder %s21, %s24
      %p33 = scmp.eq.s32.totalorder %s16, 1
      %p34 = por %p32, %p33
      %p35 = scmp.ne.s32.totalorder %s24, %s25
      %p36 = scmp.eq.s32.totalorder %s16, 0
      %p37 = por %p35, %p36
      %p38 = scmp.ne.s32.totalorder %s24, %s25
      %p39 = scmp.eq.s32.totalorder %s17, 1
      %p40 = por %p38, %p39
      %p42 = scmp.ne.s32.totalorder %s25, %s41
      %p43 = scmp.eq.s32.totalorder %s17, 0
      %p44 = por %p42, %p43
      %s46 = sadd.s32 %s45, 1
      %p49 = scmp.eq.s32.totalorder %s11, 1
      %p50 = scmp.ne.s32.totalorder %s45, %s47
      %p51 = scmp.eq.s32.totalorder %s11, 0
      %p52 = por %p50, %p51
      %p53 = scmp.ne.s32.totalorder %s45, %s47
      %p54 = scmp.eq.s32.totalorder %s16, 1
      %p55 = por %p53, %p54
      %p56 = scmp.ne.s32.totalorder %s47, %s48
      %p57 = scmp.eq.s32.totalorder %s16, 0
      %p58 = por %p56, %p57
      %p59 = scmp.ne.s32.totalorder %s47, %s48
      %p60 = scmp.eq.s32.totalorder %s17, 1
      %p61 = por %p59, %p60
      %p63 = scmp.ne.s32.totalorder %s48, %s62
      %p64 = scmp.eq.s32.totalorder %s17, 0
      %p65 = por %p63, %p64
      %s67 = sadd.s32 %s66, 1
      %p70 = scmp.eq.s32.totalorder %s11, 1
      %p71 = scmp.ne.s32.totalorder %s66, %s68
      %p72 = scmp.eq.s32.totalorder %s11, 0
      %p73 = por %p71, %p72
      %p74 = scmp.ne.s32.totalorder %s66, %s68
      %p75 = scmp.eq.s32.totalorder %s16, 1
      %p76 = por %p74, %p75
      %p77 = scmp.ne.s32.totalorder %s68, %s69
      %p78 = scmp.eq.s32.totalorder %s16, 0
      %p79 = por %p77, %p78
      %p80 = scmp.ne.s32.totalorder %s68, %s69
      %p81 = scmp.eq.s32.totalorder %s17, 1
      %p82 = por %p80, %p81
      %p84 = scmp.ne.s32.totalorder %s69, %s83
      %p85 = scmp.eq.s32.totalorder %s17, 0
      %p86 = por %p84, %p85
      %s87 = ssub.s32 %s11, %s18
      %p88 = scmp.eq.s32.totalorder %s87, 0
      %s90 = sadd.s32 %s89, 1
      %s91 = scalar_select %p88, %s89, %s90
      %p94 = pneg %p88
      %p95 = scmp.eq.s32.totalorder %s11, 1
      %p96 = por %p94, %p95
      %p97 = scmp.ne.s32.totalorder %s89, %s92
      %p98 = scmp.eq.s32.totalorder %s11, 0
      %p99 = por %p97, %p98
      %p100 = scmp.ne.s32.totalorder %s89, %s92
      %p101 = scmp.eq.s32.totalorder %s16, 1
      %p102 = por %p100, %p101
      %p103 = scmp.ne.s32.totalorder %s92, %s93
      %p104 = scmp.eq.s32.totalorder %s16, 0
      %p105 = por %p103, %p104
      %p106 = scmp.ne.s32.totalorder %s92, %s93
      %p107 = scmp.eq.s32.totalorder %s17, 1
      %p108 = por %p106, %p107
      %p110 = scmp.ne.s32.totalorder %s93, %s109
      %p111 = scmp.eq.s32.totalorder %s17, 0
      %p112 = por %p110, %p111
      %p113 = scmp.le.s32.totalorder 1, %s11
      %p114 = scmp.lt.s32.totalorder %s11, 3
      %p115 = pnand %p113, %p114
      %p116 = pneg %p115
      // Predicated region
      $region9: #{_stc_forward.1} parent=5 // pred_check
        _
      $region10: #{_stc_forward.1} parent=5 // pred_check_branch
        %118 = sbr.rel (%p115) target = $region12
      $region11: #{_stc_forward.1} parent=5 // pred_region
        %s119 = ssub.s32 %s11, 1
        // Predicated region
        $region13: #{_stc_forward.1} parent=11 // pred_check
          %p120 = pneg %p58
        $region14: #{_stc_forward.1} parent=11 // pred_check_branch
          %122 = sbr.rel (%p120) target = $region16
        $region15: #{_stc_forward.1} parent=11 // pred_region
          %s124 = ssub.s32 3072, 3072
          %125 = vsyncadd [#allocation3], %s124
          %s126 = sshll.u32 [#allocation2], 4
          %s127 = int_to_ptr.vmem [resolvable:$true] %s126
          %132 = dma.hbm_to_vmem [thread:$0]  %s1, 3072, %s127, [#allocation3], 384, 384, 24
        $region16: #{_stc_forward.1} parent=11 // pred_fallthru
          _
        // Predicated region
        $region17: #{_stc_forward.1} parent=11 // pred_check
          %p133 = pneg %p79
        $region18: #{_stc_forward.1} parent=11 // pred_check_branch
          %135 = sbr.rel (%p133) target = $region20
        $region19: #{_stc_forward.1} parent=11 // pred_region
          %s137 = ssub.s32 15360, 15360
          %138 = vsyncadd [#allocation5], %s137
          %s139 = sshll.u32 [#allocation4], 4
          %s140 = int_to_ptr.vmem [resolvable:$true] %s139
          %145 = dma.hbm_to_vmem [thread:$0]  %s2, 15360, %s140, [#allocation5], 320, 320, 20
        $region20: #{_stc_forward.1} parent=11 // pred_fallthru
          _
      $region12: #{_stc_forward.1} parent=5 // pred_fallthru
        _
      %p146 = scmp.lt.s32.totalorder %s11, 2
      // Predicated region
      $region21: #{_stc_forward.1} parent=5 // pred_check
        %p147 = pneg %p146
      $region22: #{_stc_forward.1} parent=5 // pred_check_branch
        %149 = sbr.rel (%p147) target = $region24
      $region23: #{_stc_forward.1} parent=5 // pred_region
        // Predicated region
        $region25: #{_stc_forward.1} parent=23 // pred_check
          %p150 = pneg %p31
        $region26: #{_stc_forward.1} parent=23 // pred_check_branch
          %152 = sbr.rel (%p150) target = $region28
        $region27: #{_stc_forward.1} parent=23 // pred_region
          %s153 = smul.u32 2, %s11
          %p154 = scmp.lt.s32.totalorder %s153, 3
          %s155 = scalar_select %p154, %s153, 3
          %s156 = smul.addr %s155, 4
          %s157 = scalar_lea.vmem %s0, %s156
          %s158 = smul.u32 2, %s11
        $region28: #{_stc_forward.1} parent=23 // pred_fallthru
          _
      $region24: #{_stc_forward.1} parent=5 // pred_fallthru
        _
      %p159 = scmp.le.s32.totalorder 1, %s11
      %p160 = scmp.lt.s32.totalorder %s11, 3
      %p161 = pnand %p159, %p160
      %p162 = pneg %p161
      // Predicated region
      $region29: #{_stc_forward.1} parent=5 // pred_check
        _
      $region30: #{_stc_forward.1} parent=5 // pred_check_branch
        %164 = sbr.rel (%p161) target = $region32
      $region31: #{_stc_forward.1} parent=5 // pred_region
        %s165 = ssub.s32 %s11, 1
        // Predicated region
        $region33: #{_stc_forward.1} parent=31 // pred_check
          %p166 = pneg %p58
        $region34: #{_stc_forward.1} parent=31 // pred_check_branch
          %168 = sbr.rel (%p166) target = $region36
        $region35: #{_stc_forward.1} parent=31 // pred_region
          %169 = dma.done [#allocation3], 3072
        $region36: #{_stc_forward.1} parent=31 // pred_fallthru
          _
        // Predicated region
        $region37: #{_stc_forward.1} parent=31 // pred_check
          %p170 = pneg %p79
        $region38: #{_stc_forward.1} parent=31 // pred_check_branch
          %172 = sbr.rel (%p170) target = $region40
        $region39: #{_stc_forward.1} parent=31 // pred_region
          %173 = dma.done [#allocation5], 15360
        $region40: #{_stc_forward.1} parent=31 // pred_fallthru
          _
        %s174 = smul.u32 2, %s16
        %p175 = scmp.lt.s32.totalorder %s174, 3
        %s176 = scalar_select %p175, %s174, 3
        %s177 = smul.addr %s176, 4
        %s178 = scalar_lea.vmem %s0, %s177
        %p179 = pneg %p37
        %p180 = pneg %p34
        %p181 = pneg %p58
        %p182 = pneg %p55
        %p183 = pneg %p79
        %p184 = pneg %p76
        %p185 = pneg %p105
        %p186 = pneg %p102
        %s187 = smul.u32 2, %s16
        %p188 = scmp.lt.s32.totalorder %s187, 3
        %s189 = scalar_select %p188, %s187, 3
        %s190 = smul.addr %s189, 5
        %s191 = smul.addr %s190, 8
        %s192 = scalar_lea.vmem %s3, %s191
        %s193 = smul.u32 2, %s16
        %p194 = scmp.lt.s32.totalorder %s193, 3
        %s195 = scalar_select %p194, %s193, 3
        %s196 = smul.addr %s195, 4
        %s197 = scalar_lea.vmem %s0, %s196
        %s198 = smul.u32 2, %s16
        %s199 = smul.u32 2, %s16
        %p200 = scmp.lt.s32.totalorder %s199, 3
        %s201 = scalar_select %p200, %s199, 3
        %s202 = smul.addr %s201, 5
        %s203 = smul.addr %s202, 8
        %s204 = scalar_lea.vmem %s3, %s203
        %s205 = smul.u32 2, %s16
        %v207 = vld [vmem:[%s197] sm:$0xf]
        %v208 = vld [vmem:[%s197 + $0x4] sm:$0xf]
        %v209 = vld [vmem:[#allocation2] sm:$0xff]
        %v210 = vld [vmem:[#allocation2 + $0x8] sm:$0xff]
        %v211 = vld [vmem:[#allocation2 + $0x10] sm:$0xff]
        %v212 = vld [vmem:[#allocation2 + $0x18] sm:$0xff]
        %v213 = vld [vmem:[#allocation2 + $0x20] sm:$0xff]
        %v214 = vld [vmem:[#allocation2 + $0x28] sm:$0xff]
        %v215 = vld [vmem:[#allocation2 + $0x30] sm:$0xff]
        %v216 = vld [vmem:[#allocation2 + $0x38] sm:$0xff]
        %v217 = vld [vmem:[#allocation2 + $0x40] sm:$0xff]
        %v218 = vld [vmem:[#allocation2 + $0x48] sm:$0xff]
        %v219 = vld [vmem:[#allocation2 + $0x50] sm:$0xff]
        %v220 = vld [vmem:[#allocation2 + $0x58] sm:$0xff]
        %v221 = vld [vmem:[#allocation2 + $0x60] sm:$0xff]
        %v222 = vld [vmem:[#allocation2 + $0x68] sm:$0xff]
        %v223 = vld [vmem:[#allocation2 + $0x70] sm:$0xff]
        %v224 = vld [vmem:[#allocation2 + $0x78] sm:$0xff]
        %v225 = vld [vmem:[#allocation2 + $0x80] sm:$0xff]
        %v226 = vld [vmem:[#allocation2 + $0x88] sm:$0xff]
        %v227 = vld [vmem:[#allocation2 + $0x90] sm:$0xff]
        %v228 = vld [vmem:[#allocation2 + $0x98] sm:$0xff]
        %v229 = vld [vmem:[#allocation2 + $0xa0] sm:$0xff]
        %v230 = vld [vmem:[#allocation2 + $0xa8] sm:$0xff]
        %v231 = vld [vmem:[#allocation2 + $0xb0] sm:$0xff]
        %v232 = vld [vmem:[#allocation2 + $0xb8] sm:$0xff]
        %v235 = vunpack.c.l.b16 %v207
        %v236 = vunpack.c.l.b16 %v208
        %v237 = vpack.c.b16 %v236, %v235
        %v262 = vunpack.c.l.b16 %v209
        %v263 = vunpack.c.h.b16 %v209
        %v264 = vunpack.c.l.b16 %v210
        %v265 = vunpack.c.h.b16 %v210
        %v266 = vunpack.c.l.b16 %v211
        %v267 = vunpack.c.h.b16 %v211
        %v268 = vunpack.c.l.b16 %v212
        %v269 = vunpack.c.h.b16 %v212
        %v270 = vunpack.c.l.b16 %v213
        %v271 = vunpack.c.h.b16 %v213
        %v272 = vunpack.c.l.b16 %v214
        %v273 = vunpack.c.h.b16 %v214
        %v274 = vunpack.c.l.b16 %v215
        %v275 = vunpack.c.h.b16 %v215
        %v276 = vunpack.c.l.b16 %v216
        %v277 = vunpack.c.h.b16 %v216
        %v278 = vunpack.c.l.b16 %v217
        %v279 = vunpack.c.h.b16 %v217
        %v280 = vunpack.c.l.b16 %v218
        %v281 = vunpack.c.h.b16 %v218
        %v282 = vunpack.c.l.b16 %v219
        %v283 = vunpack.c.h.b16 %v219
        %v284 = vunpack.c.l.b16 %v220
        %v285 = vunpack.c.h.b16 %v220
        %v286 = vunpack.c.l.b16 %v221
        %v287 = vunpack.c.h.b16 %v221
        %v288 = vunpack.c.l.b16 %v222
        %v289 = vunpack.c.h.b16 %v222
        %v290 = vunpack.c.l.b16 %v223
        %v291 = vunpack.c.h.b16 %v223
        %v292 = vunpack.c.l.b16 %v224
        %v293 = vunpack.c.h.b16 %v224
        %v294 = vunpack.c.l.b16 %v225
        %v295 = vunpack.c.h.b16 %v225
        %v296 = vunpack.c.l.b16 %v226
        %v297 = vunpack.c.h.b16 %v226
        %v298 = vunpack.c.l.b16 %v227
        %v299 = vunpack.c.h.b16 %v227
        %v300 = vunpack.c.l.b16 %v228
        %v301 = vunpack.c.h.b16 %v228
        %v302 = vunpack.c.l.b16 %v229
        %v303 = vunpack.c.h.b16 %v229
        %v304 = vunpack.c.l.b16 %v230
        %v305 = vunpack.c.h.b16 %v230
        %v306 = vunpack.c.l.b16 %v231
        %v307 = vunpack.c.h.b16 %v231
        %v308 = vunpack.c.l.b16 %v232
        %v309 = vunpack.c.h.b16 %v232
        %v310 = vpack.c.b16 %v268, %v262
        %v311 = vpack.c.b16 %v269, %v263
        %v312 = vpack.c.b16 %v270, %v264
        %v313 = vpack.c.b16 %v271, %v265
        %v314 = vpack.c.b16 %v272, %v266
        %v315 = vpack.c.b16 %v273, %v267
        %v316 = vpack.c.b16 %v280, %v274
        %v317 = vpack.c.b16 %v281, %v275
        %v318 = vpack.c.b16 %v282, %v276
        %v319 = vpack.c.b16 %v283, %v277
        %v320 = vpack.c.b16 %v284, %v278
        %v321 = vpack.c.b16 %v285, %v279
        %v322 = vpack.c.b16 %v292, %v286
        %v323 = vpack.c.b16 %v293, %v287
        %v324 = vpack.c.b16 %v294, %v288
        %v325 = vpack.c.b16 %v295, %v289
        %v326 = vpack.c.b16 %v296, %v290
        %v327 = vpack.c.b16 %v297, %v291
        %v328 = vpack.c.b16 %v304, %v298
        %v329 = vpack.c.b16 %v305, %v299
        %v330 = vpack.c.b16 %v306, %v300
        %v331 = vpack.c.b16 %v307, %v301
        %v332 = vpack.c.b16 %v308, %v302
        %v333 = vpack.c.b16 %v309, %v303
        %vm358 = vcmask 523264
        %v360 = vsel %vm358, %v237, 0
        %362 = vmatprep.subr.bf16.mxu0 %v311
        %363 = vmatpush1.bf16.msra.mxu0 %v310
        %364 = vmatprep.subr.bf16.mxu0 %v317
        %365 = vmatpush1.bf16.msra.mxu0 %v316
        %366 = vmatprep.subr.bf16.mxu0 %v323
        %367 = vmatpush1.bf16.msra.mxu0 %v322
        %368 = vmatprep.subr.bf16.mxu0 %v329
        %369 = vmatpush1.bf16.msra.mxu0 %v328
        %370 = vmatprep.subr.bf16.mxu0 0
        %371 = vmatpush1.bf16.msra.mxu0 0
        %372 = vmatprep.subr.bf16.mxu0 0
        %373 = vmatpush1.bf16.msra.mxu0 0
        %374 = vmatprep.subr.bf16.mxu0 0
        %375 = vmatpush1.bf16.msra.mxu0 0
        %376 = vmatprep.subr.bf16.mxu0 0
        %377 = vmatpush1.bf16.msra.mxu0 0
        %378 = vmatprep.subr.bf16.mxu0 0
        %379 = vmatpush1.bf16.msra.mxu0 0
        %380 = vmatprep.subr.bf16.mxu0 0
        %381 = vmatpush1.bf16.msra.mxu0 0
        %382 = vmatprep.subr.bf16.mxu0 0
        %383 = vmatpush1.bf16.msra.mxu0 0
        %384 = vmatprep.subr.bf16.mxu0 0
        %385 = vmatpush1.bf16.msra.mxu0 0
        %386 = vmatprep.subr.bf16.mxu0 0
        %387 = vmatpush1.bf16.msra.mxu0 0
        %388 = vmatprep.subr.bf16.mxu0 0
        %389 = vmatpush1.bf16.msra.mxu0 0
        %390 = vmatprep.subr.bf16.mxu0 0
        %391 = vmatpush1.bf16.msra.mxu0 0
        %392 = vmatprep.subr.bf16.mxu0 0
        %393 = vmatpush1.bf16.msra.mxu0 0
        %394 = vmatprep.mubr.bf16.mxu0 0
        %395 = vmatmul.mubr.bf16.gmra.mrb[0].mxu0 %v360
        %v396 = vpop.f32.mrb[0].mxu0
        %v397 = vadd.f32 0.0, %v396
        %v398 = vpop.f32.mrb[0].mxu0
        %v399 = vadd.f32 0.0, %v398
        %v400 = vpop.f32.mrb[0].mxu0
        %v401 = vadd.f32 0.0, %v400
        %v402 = vpop.f32.mrb[0].mxu0
        %v403 = vadd.f32 0.0, %v402
        %404 = vdwg.mxu0
        %405 = vmatprep.subr.bf16.mxu0 %v313
        %406 = vmatpush1.bf16.msra.mxu0 %v312
        %407 = vmatprep.subr.bf16.mxu0 %v319
        %408 = vmatpush1.bf16.msra.mxu0 %v318
        %409 = vmatprep.subr.bf16.mxu0 %v325
        %410 = vmatpush1.bf16.msra.mxu0 %v324
        %411 = vmatprep.subr.bf16.mxu0 %v331
        %412 = vmatpush1.bf16.msra.mxu0 %v330
        %413 = vmatprep.subr.bf16.mxu0 0
        %414 = vmatpush1.bf16.msra.mxu0 0
        %415 = vmatprep.subr.bf16.mxu0 0
        %416 = vmatpush1.bf16.msra.mxu0 0
        %417 = vmatprep.subr.bf16.mxu0 0
        %418 = vmatpush1.bf16.msra.mxu0 0
        %419 = vmatprep.subr.bf16.mxu0 0
        %420 = vmatpush1.bf16.msra.mxu0 0
        %421 = vmatprep.subr.bf16.mxu0 0
        %422 = vmatpush1.bf16.msra.mxu0 0
        %423 = vmatprep.subr.bf16.mxu0 0
        %424 = vmatpush1.bf16.msra.mxu0 0
        %425 = vmatprep.subr.bf16.mxu0 0
        %426 = vmatpush1.bf16.msra.mxu0 0
        %427 = vmatprep.subr.bf16.mxu0 0
        %428 = vmatpush1.bf16.msra.mxu0 0
        %429 = vmatprep.subr.bf16.mxu0 0
        %430 = vmatpush1.bf16.msra.mxu0 0
        %431 = vmatprep.subr.bf16.mxu0 0
        %432 = vmatpush1.bf16.msra.mxu0 0
        %433 = vmatprep.subr.bf16.mxu0 0
        %434 = vmatpush1.bf16.msra.mxu0 0
        %435 = vmatprep.subr.bf16.mxu0 0
        %436 = vmatpush1.bf16.msra.mxu0 0
        %437 = vmatprep.mubr.bf16.mxu0 0
        %438 = vmatmul.mubr.bf16.gmra.mrb[0].mxu0 %v360
        %v439 = vpop.f32.mrb[0].mxu0
        %v440 = vadd.f32 0.0, %v439
        %v441 = vpop.f32.mrb[0].mxu0
        %v442 = vadd.f32 0.0, %v441
        %v443 = vpop.f32.mrb[0].mxu0
        %v444 = vadd.f32 0.0, %v443
        %v445 = vpop.f32.mrb[0].mxu0
        %v446 = vadd.f32 0.0, %v445
        %447 = vdwg.mxu0
        %448 = vmatprep.subr.bf16.mxu0 %v315
        %449 = vmatpush1.bf16.msra.mxu0 %v314
        %450 = vmatprep.subr.bf16.mxu0 %v321
        %451 = vmatpush1.bf16.msra.mxu0 %v320
        %452 = vmatprep.subr.bf16.mxu0 %v327
        %453 = vmatpush1.bf16.msra.mxu0 %v326
        %454 = vmatprep.subr.bf16.mxu0 %v333
        %455 = vmatpush1.bf16.msra.mxu0 %v332
        %456 = vmatprep.subr.bf16.mxu0 0
        %457 = vmatpush1.bf16.msra.mxu0 0
        %458 = vmatprep.subr.bf16.mxu0 0
        %459 = vmatpush1.bf16.msra.mxu0 0
        %460 = vmatprep.subr.bf16.mxu0 0
        %461 = vmatpush1.bf16.msra.mxu0 0
        %462 = vmatprep.subr.bf16.mxu0 0
        %463 = vmatpush1.bf16.msra.mxu0 0
        %464 = vmatprep.subr.bf16.mxu0 0
        %465 = vmatpush1.bf16.msra.mxu0 0
        %466 = vmatprep.subr.bf16.mxu0 0
        %467 = vmatpush1.bf16.msra.mxu0 0
        %468 = vmatprep.subr.bf16.mxu0 0
        %469 = vmatpush1.bf16.msra.mxu0 0
        %470 = vmatprep.subr.bf16.mxu0 0
        %471 = vmatpush1.bf16.msra.mxu0 0
        %472 = vmatprep.subr.bf16.mxu0 0
        %473 = vmatpush1.bf16.msra.mxu0 0
        %474 = vmatprep.subr.bf16.mxu0 0
        %475 = vmatpush1.bf16.msra.mxu0 0
        %476 = vmatprep.subr.bf16.mxu0 0
        %477 = vmatpush1.bf16.msra.mxu0 0
        %478 = vmatprep.subr.bf16.mxu0 0
        %479 = vmatpush1.bf16.msra.mxu0 0
        %480 = vmatprep.mubr.bf16.mxu0 0
        %481 = vmatmul.mubr.bf16.gmra.mrb[0].mxu0 %v360
        %v482 = vpop.f32.mrb[0].mxu0
        %v483 = vadd.f32 0.0, %v482
        %v484 = vpop.f32.mrb[0].mxu0
        %v485 = vadd.f32 0.0, %v484
        %v486 = vpop.f32.mrb[0].mxu0
        %v487 = vadd.f32 0.0, %v486
        %v488 = vpop.f32.mrb[0].mxu0
        %v489 = vadd.f32 0.0, %v488
        %490 = vdwg.mxu0
        %v491 = vmul.f32 %v397, %v397
        %v492 = vmul.f32 %v399, %v399
        %v493 = vmul.f32 %v440, %v440
        %v494 = vmul.f32 %v401, %v401
        %v495 = vmul.f32 %v403, %v403
        %v496 = vmul.f32 %v444, %v444
        %v497 = vmul.f32 %v442, %v442
        %v498 = vmul.f32 %v483, %v483
        %v499 = vmul.f32 %v485, %v485
        %v500 = vmul.f32 %v446, %v446
        %v501 = vmul.f32 %v487, %v487
        %v502 = vmul.f32 %v489, %v489
        %v503 = vadd.f32 %v491, %v497
        %v504 = vadd.f32 %v492, %v498
        %v505 = vadd.f32 %v493, %v499
        %v506 = vadd.f32 %v494, %v500
        %v507 = vadd.f32 %v495, %v501
        %v508 = vadd.f32 %v496, %v502
        %v509 = vrsqrt.pop %v503
        %v510 = vmul.f32 %v503, %v509
        %vm511 = vcmp.eq.f32.partialorder %v503, inf
        %v512 = vsel %vm511, %v503, %v510
        %vm513 = vcmp.eq.f32.partialorder %v503, 0.0
        %v514 = vand.u32 %v503, 2147483648
        %v515 = vsel %vm513, %v514, %v512
        %v516 = vrsqrt.pop %v504
        %v517 = vmul.f32 %v504, %v516
        %vm518 = vcmp.eq.f32.partialorder %v504, inf
        %v519 = vsel %vm518, %v504, %v517
        %vm520 = vcmp.eq.f32.partialorder %v504, 0.0
        %v521 = vand.u32 %v504, 2147483648
        %v522 = vsel %vm520, %v521, %v519
        %v523 = vrsqrt.pop %v505
        %v524 = vmul.f32 %v505, %v523
        %vm525 = vcmp.eq.f32.partialorder %v505, inf
        %v526 = vsel %vm525, %v505, %v524
        %vm527 = vcmp.eq.f32.partialorder %v505, 0.0
        %v528 = vand.u32 %v505, 2147483648
        %v529 = vsel %vm527, %v528, %v526
        %v530 = vrsqrt.pop %v506
        %v531 = vmul.f32 %v506, %v530
        %vm532 = vcmp.eq.f32.partialorder %v506, inf
        %v533 = vsel %vm532, %v506, %v531
        %vm534 = vcmp.eq.f32.partialorder %v506, 0.0
        %v535 = vand.u32 %v506, 2147483648
        %v536 = vsel %vm534, %v535, %v533
        %v537 = vrsqrt.pop %v507
        %v538 = vmul.f32 %v507, %v537
        %vm539 = vcmp.eq.f32.partialorder %v507, inf
        %v540 = vsel %vm539, %v507, %v538
        %vm541 = vcmp.eq.f32.partialorder %v507, 0.0
        %v542 = vand.u32 %v507, 2147483648
        %v543 = vsel %vm541, %v542, %v540
        %v544 = vrsqrt.pop %v508
        %v545 = vmul.f32 %v508, %v544
        %vm546 = vcmp.eq.f32.partialorder %v508, inf
        %v547 = vsel %vm546, %v508, %v545
        %vm548 = vcmp.eq.f32.partialorder %v508, 0.0
        %v549 = vand.u32 %v508, 2147483648
        %v550 = vsel %vm548, %v549, %v547
        %v551 = vadd.f32 %v515, 1e-20
        %v552 = vadd.f32 %v522, 1e-20
        %v553 = vadd.f32 %v529, 1e-20
        %v554 = vadd.f32 %v536, 1e-20
        %v555 = vadd.f32 %v543, 1e-20
        %v556 = vadd.f32 %v550, 1e-20
        %v557 = vlog2.pop %v551
        %v558 = vmul.f32 %v557, 0.6931472
        %v559 = vlog2.pop %v552
        %v560 = vmul.f32 %v559, 0.6931472
        %v561 = vlog2.pop %v553
        %v562 = vmul.f32 %v561, 0.6931472
        %v563 = vlog2.pop %v554
        %v564 = vmul.f32 %v563, 0.6931472
        %v565 = vlog2.pop %v555
        %v566 = vmul.f32 %v565, 0.6931472
        %v567 = vlog2.pop %v556
        %v568 = vmul.f32 %v567, 0.6931472
        %v569 = vpack.c.bf16 %v564, %v558
        %v570 = vpack.c.bf16 %v566, %v560
        %v571 = vpack.c.bf16 %v568, %v562
        %v572 = vld [vmem:[#allocation4] sm:$0xff]
        %v573 = vld [vmem:[#allocation4 + $0x8] sm:$0xff]
        %v574 = vld [vmem:[#allocation4 + $0x10] sm:$0xf]
        %v575 = vld [vmem:[#allocation4 + $0x14] sm:$0xff]
        %v576 = vld [vmem:[#allocation4 + $0x1c] sm:$0xff]
        %v577 = vld [vmem:[#allocation4 + $0x24] sm:$0xf]
        %v578 = vld [vmem:[#allocation4 + $0x28] sm:$0xff]
        %v579 = vld [vmem:[#allocation4 + $0x30] sm:$0xff]
        %v580 = vld [vmem:[#allocation4 + $0x38] sm:$0xf]
        %v581 = vld [vmem:[#allocation4 + $0x3c] sm:$0xff]
        %v582 = vld [vmem:[#allocation4 + $0x44] sm:$0xff]
        %v583 = vld [vmem:[#allocation4 + $0x4c] sm:$0xf]
        %v584 = vld [vmem:[#allocation4 + $0x50] sm:$0xff]
        %v585 = vld [vmem:[#allocation4 + $0x58] sm:$0xff]
        %v586 = vld [vmem:[#allocation4 + $0x60] sm:$0xf]
        %v587 = vld [vmem:[#allocation4 + $0x64] sm:$0xff]
        %v588 = vld [vmem:[#allocation4 + $0x6c] sm:$0xff]
        %v589 = vld [vmem:[#allocation4 + $0x74] sm:$0xf]
        %v590 = vld [vmem:[#allocation4 + $0x78] sm:$0xff]
        %v591 = vld [vmem:[#allocation4 + $0x80] sm:$0xff]
        %v592 = vld [vmem:[#allocation4 + $0x88] sm:$0xf]
        %v593 = vld [vmem:[#allocation4 + $0x8c] sm:$0xff]
        %v594 = vld [vmem:[#allocation4 + $0x94] sm:$0xff]
        %v595 = vld [vmem:[#allocation4 + $0x9c] sm:$0xf]
        %v596 = vld [vmem:[#allocation4 + $0xa0] sm:$0xff]
        %v597 = vld [vmem:[#allocation4 + $0xa8] sm:$0xff]
        %v598 = vld [vmem:[#allocation4 + $0xb0] sm:$0xf]
        %v599 = vld [vmem:[#allocation4 + $0xb4] sm:$0xff]
        %v600 = vld [vmem:[#allocation4 + $0xbc] sm:$0xff]
        %v601 = vld [vmem:[#allocation4 + $0xc4] sm:$0xf]
        %v602 = vld [vmem:[#allocation4 + $0xc8] sm:$0xff]
        %v603 = vld [vmem:[#allocation4 + $0xd0] sm:$0xff]
        %v604 = vld [vmem:[#allocation4 + $0xd8] sm:$0xf]
        %v605 = vld [vmem:[#allocation4 + $0xdc] sm:$0xff]
        %v606 = vld [vmem:[#allocation4 + $0xe4] sm:$0xff]
        %v607 = vld [vmem:[#allocation4 + $0xec] sm:$0xf]
        %v608 = vld [vmem:[#allocation4 + $0xf0] sm:$0xff]
        %v609 = vld [vmem:[#allocation4 + $0xf8] sm:$0xff]
        %v610 = vld [vmem:[#allocation4 + $0x100] sm:$0xf]
        %v611 = vld [vmem:[#allocation4 + $0x104] sm:$0xff]
        %v612 = vld [vmem:[#allocation4 + $0x10c] sm:$0xff]
        %v613 = vld [vmem:[#allocation4 + $0x114] sm:$0xf]
        %v614 = vld [vmem:[#allocation4 + $0x118] sm:$0xff]
        %v615 = vld [vmem:[#allocation4 + $0x120] sm:$0xff]
        %v616 = vld [vmem:[#allocation4 + $0x128] sm:$0xf]
        %v617 = vld [vmem:[#allocation4 + $0x12c] sm:$0xff]
        %v618 = vld [vmem:[#allocation4 + $0x134] sm:$0xff]
        %v619 = vld [vmem:[#allocation4 + $0x13c] sm:$0xf]
        %v620 = vld [vmem:[#allocation4 + $0x140] sm:$0xff]
        %v621 = vld [vmem:[#allocation4 + $0x148] sm:$0xff]
        %v622 = vld [vmem:[#allocation4 + $0x150] sm:$0xf]
        %v623 = vld [vmem:[#allocation4 + $0x154] sm:$0xff]
        %v624 = vld [vmem:[#allocation4 + $0x15c] sm:$0xff]
        %v625 = vld [vmem:[#allocation4 + $0x164] sm:$0xf]
        %v626 = vld [vmem:[#allocation4 + $0x168] sm:$0xff]
        %v627 = vld [vmem:[#allocation4 + $0x170] sm:$0xff]
        %v628 = vld [vmem:[#allocation4 + $0x178] sm:$0xf]
        %v629 = vld [vmem:[#allocation4 + $0x17c] sm:$0xff]
        %v630 = vld [vmem:[#allocation4 + $0x184] sm:$0xff]
        %v631 = vld [vmem:[#allocation4 + $0x18c] sm:$0xf]
        %v632 = vld [vmem:[#allocation4 + $0x190] sm:$0xff]
        %v633 = vld [vmem:[#allocation4 + $0x198] sm:$0xff]
        %v634 = vld [vmem:[#allocation4 + $0x1a0] sm:$0xf]
        %v635 = vld [vmem:[#allocation4 + $0x1a4] sm:$0xff]
        %v636 = vld [vmem:[#allocation4 + $0x1ac] sm:$0xff]
        %v637 = vld [vmem:[#allocation4 + $0x1b4] sm:$0xf]
        %v638 = vld [vmem:[#allocation4 + $0x1b8] sm:$0xff]
        %v639 = vld [vmem:[#allocation4 + $0x1c0] sm:$0xff]
        %v640 = vld [vmem:[#allocation4 + $0x1c8] sm:$0xf]
        %v641 = vld [vmem:[#allocation4 + $0x1cc] sm:$0xff]
        %v642 = vld [vmem:[#allocation4 + $0x1d4] sm:$0xff]
        %v643 = vld [vmem:[#allocation4 + $0x1dc] sm:$0xf]
        %v644 = vld [vmem:[#allocation4 + $0x1e0] sm:$0xff]
        %v645 = vld [vmem:[#allocation4 + $0x1e8] sm:$0xff]
        %v646 = vld [vmem:[#allocation4 + $0x1f0] sm:$0xf]
        %v647 = vld [vmem:[#allocation4 + $0x1f4] sm:$0xff]
        %v648 = vld [vmem:[#allocation4 + $0x1fc] sm:$0xff]
        %v649 = vld [vmem:[#allocation4 + $0x204] sm:$0xf]
        %v650 = vld [vmem:[#allocation4 + $0x208] sm:$0xff]
        %v651 = vld [vmem:[#allocation4 + $0x210] sm:$0xff]
        %v652 = vld [vmem:[#allocation4 + $0x218] sm:$0xf]
        %v653 = vld [vmem:[#allocation4 + $0x21c] sm:$0xff]
        %v654 = vld [vmem:[#allocation4 + $0x224] sm:$0xff]
        %v655 = vld [vmem:[#allocation4 + $0x22c] sm:$0xf]
        %v656 = vld [vmem:[#allocation4 + $0x230] sm:$0xff]
        %v657 = vld [vmem:[#allocation4 + $0x238] sm:$0xff]
        %v658 = vld [vmem:[#allocation4 + $0x240] sm:$0xf]
        %v659 = vld [vmem:[#allocation4 + $0x244] sm:$0xff]
        %v660 = vld [vmem:[#allocation4 + $0x24c] sm:$0xff]
        %v661 = vld [vmem:[#allocation4 + $0x254] sm:$0xf]
        %v662 = vld [vmem:[#allocation4 + $0x258] sm:$0xff]
        %v663 = vld [vmem:[#allocation4 + $0x260] sm:$0xff]
        %v664 = vld [vmem:[#allocation4 + $0x268] sm:$0xf]
        %v665 = vld [vmem:[#allocation4 + $0x26c] sm:$0xff]
        %v666 = vld [vmem:[#allocation4 + $0x274] sm:$0xff]
        %v667 = vld [vmem:[#allocation4 + $0x27c] sm:$0xf]
        %v668 = vld [vmem:[#allocation4 + $0x280] sm:$0xff]
        %v669 = vld [vmem:[#allocation4 + $0x288] sm:$0xff]
        %v670 = vld [vmem:[#allocation4 + $0x290] sm:$0xf]
        %v671 = vld [vmem:[#allocation4 + $0x294] sm:$0xff]
        %v672 = vld [vmem:[#allocation4 + $0x29c] sm:$0xff]
        %v673 = vld [vmem:[#allocation4 + $0x2a4] sm:$0xf]
        %v674 = vld [vmem:[#allocation4 + $0x2a8] sm:$0xff]
        %v675 = vld [vmem:[#allocation4 + $0x2b0] sm:$0xff]
        %v676 = vld [vmem:[#allocation4 + $0x2b8] sm:$0xf]
        %v677 = vld [vmem:[#allocation4 + $0x2bc] sm:$0xff]
        %v678 = vld [vmem:[#allocation4 + $0x2c4] sm:$0xff]
        %v679 = vld [vmem:[#allocation4 + $0x2cc] sm:$0xf]
        %v680 = vld [vmem:[#allocation4 + $0x2d0] sm:$0xff]
        %v681 = vld [vmem:[#allocation4 + $0x2d8] sm:$0xff]
        %v682 = vld [vmem:[#allocation4 + $0x2e0] sm:$0xf]
        %v683 = vld [vmem:[#allocation4 + $0x2e4] sm:$0xff]
        %v684 = vld [vmem:[#allocation4 + $0x2ec] sm:$0xff]
        %v685 = vld [vmem:[#allocation4 + $0x2f4] sm:$0xf]
        %v686 = vld [vmem:[#allocation4 + $0x2f8] sm:$0xff]
        %v687 = vld [vmem:[#allocation4 + $0x300] sm:$0xff]
        %v688 = vld [vmem:[#allocation4 + $0x308] sm:$0xf]
        %v689 = vld [vmem:[#allocation4 + $0x30c] sm:$0xff]
        %v690 = vld [vmem:[#allocation4 + $0x314] sm:$0xff]
        %v691 = vld [vmem:[#allocation4 + $0x31c] sm:$0xf]
        %v692 = vld [vmem:[#allocation4 + $0x320] sm:$0xff]
        %v693 = vld [vmem:[#allocation4 + $0x328] sm:$0xff]
        %v694 = vld [vmem:[#allocation4 + $0x330] sm:$0xf]
        %v695 = vld [vmem:[#allocation4 + $0x334] sm:$0xff]
        %v696 = vld [vmem:[#allocation4 + $0x33c] sm:$0xff]
        %v697 = vld [vmem:[#allocation4 + $0x344] sm:$0xf]
        %v698 = vld [vmem:[#allocation4 + $0x348] sm:$0xff]
        %v699 = vld [vmem:[#allocation4 + $0x350] sm:$0xff]
        %v700 = vld [vmem:[#allocation4 + $0x358] sm:$0xf]
        %v701 = vld [vmem:[#allocation4 + $0x35c] sm:$0xff]
        %v702 = vld [vmem:[#allocation4 + $0x364] sm:$0xff]
        %v703 = vld [vmem:[#allocation4 + $0x36c] sm:$0xf]
        %v704 = vld [vmem:[#allocation4 + $0x370] sm:$0xff]
        %v705 = vld [vmem:[#allocation4 + $0x378] sm:$0xff]
        %v706 = vld [vmem:[#allocation4 + $0x380] sm:$0xf]
        %v707 = vld [vmem:[#allocation4 + $0x384] sm:$0xff]
        %v708 = vld [vmem:[#allocation4 + $0x38c] sm:$0xff]
        %v709 = vld [vmem:[#allocation4 + $0x394] sm:$0xf]
        %v710 = vld [vmem:[#allocation4 + $0x398] sm:$0xff]
        %v711 = vld [vmem:[#allocation4 + $0x3a0] sm:$0xff]
        %v712 = vld [vmem:[#allocation4 + $0x3a8] sm:$0xf]
        %v713 = vld [vmem:[#allocation4 + $0x3ac] sm:$0xff]
        %v714 = vld [vmem:[#allocation4 + $0x3b4] sm:$0xff]
        %v715 = vld [vmem:[#allocation4 + $0x3bc] sm:$0xf]
        %v860 = vunpack.c.l.b16 %v572
        %v861 = vunpack.c.h.b16 %v572
        %v862 = vunpack.c.l.b16 %v573
        %v863 = vunpack.c.h.b16 %v573
        %v864 = vunpack.c.l.b16 %v574
        %v865 = vunpack.c.l.b16 %v575
        %v866 = vunpack.c.h.b16 %v575
        %v867 = vunpack.c.l.b16 %v576
        %v868 = vunpack.c.h.b16 %v576
        %v869 = vunpack.c.l.b16 %v577
        %v870 = vunpack.c.l.b16 %v578
        %v871 = vunpack.c.h.b16 %v578
        %v872 = vunpack.c.l.b16 %v579
        %v873 = vunpack.c.h.b16 %v579
        %v874 = vunpack.c.l.b16 %v580
        %v875 = vunpack.c.l.b16 %v581
        %v876 = vunpack.c.h.b16 %v581
        %v877 = vunpack.c.l.b16 %v582
        %v878 = vunpack.c.h.b16 %v582
        %v879 = vunpack.c.l.b16 %v583
        %v880 = vunpack.c.l.b16 %v584
        %v881 = vunpack.c.h.b16 %v584
        %v882 = vunpack.c.l.b16 %v585
        %v883 = vunpack.c.h.b16 %v585
        %v884 = vunpack.c.l.b16 %v586
        %v885 = vunpack.c.l.b16 %v587
        %v886 = vunpack.c.h.b16 %v587
        %v887 = vunpack.c.l.b16 %v588
        %v888 = vunpack.c.h.b16 %v588
        %v889 = vunpack.c.l.b16 %v589
        %v890 = vunpack.c.l.b16 %v590
        %v891 = vunpack.c.h.b16 %v590
        %v892 = vunpack.c.l.b16 %v591
        %v893 = vunpack.c.h.b16 %v591
        %v894 = vunpack.c.l.b16 %v592
        %v895 = vunpack.c.l.b16 %v593
        %v896 = vunpack.c.h.b16 %v593
        %v897 = vunpack.c.l.b16 %v594
        %v898 = vunpack.c.h.b16 %v594
        %v899 = vunpack.c.l.b16 %v595
        %v900 = vunpack.c.l.b16 %v596
        %v901 = vunpack.c.h.b16 %v596
        %v902 = vunpack.c.l.b16 %v597
        %v903 = vunpack.c.h.b16 %v597
        %v904 = vunpack.c.l.b16 %v598
        %v905 = vunpack.c.l.b16 %v599
        %v906 = vunpack.c.h.b16 %v599
        %v907 = vunpack.c.l.b16 %v600
        %v908 = vunpack.c.h.b16 %v600
        %v909 = vunpack.c.l.b16 %v601
        %v910 = vunpack.c.l.b16 %v602
        %v911 = vunpack.c.h.b16 %v602
        %v912 = vunpack.c.l.b16 %v603
        %v913 = vunpack.c.h.b16 %v603
        %v914 = vunpack.c.l.b16 %v604
        %v915 = vunpack.c.l.b16 %v605
        %v916 = vunpack.c.h.b16 %v605
        %v917 = vunpack.c.l.b16 %v606
        %v918 = vunpack.c.h.b16 %v606
        %v919 = vunpack.c.l.b16 %v607
        %v920 = vunpack.c.l.b16 %v608
        %v921 = vunpack.c.h.b16 %v608
        %v922 = vunpack.c.l.b16 %v609
        %v923 = vunpack.c.h.b16 %v609
        %v924 = vunpack.c.l.b16 %v610
        %v925 = vunpack.c.l.b16 %v611
        %v926 = vunpack.c.h.b16 %v611
        %v927 = vunpack.c.l.b16 %v612
        %v928 = vunpack.c.h.b16 %v612
        %v929 = vunpack.c.l.b16 %v613
        %v930 = vunpack.c.l.b16 %v614
        %v931 = vunpack.c.h.b16 %v614
        %v932 = vunpack.c.l.b16 %v615
        %v933 = vunpack.c.h.b16 %v615
        %v934 = vunpack.c.l.b16 %v616
        %v935 = vunpack.c.l.b16 %v617
        %v936 = vunpack.c.h.b16 %v617
        %v937 = vunpack.c.l.b16 %v618
        %v938 = vunpack.c.h.b16 %v618
        %v939 = vunpack.c.l.b16 %v619
        %v940 = vunpack.c.l.b16 %v620
        %v941 = vunpack.c.h.b16 %v620
        %v942 = vunpack.c.l.b16 %v621
        %v943 = vunpack.c.h.b16 %v621
        %v944 = vunpack.c.l.b16 %v622
        %v945 = vunpack.c.l.b16 %v623
        %v946 = vunpack.c.h.b16 %v623
        %v947 = vunpack.c.l.b16 %v624
        %v948 = vunpack.c.h.b16 %v624
        %v949 = vunpack.c.l.b16 %v625
        %v950 = vunpack.c.l.b16 %v626
        %v951 = vunpack.c.h.b16 %v626
        %v952 = vunpack.c.l.b16 %v627
        %v953 = vunpack.c.h.b16 %v627
        %v954 = vunpack.c.l.b16 %v628
        %v955 = vunpack.c.l.b16 %v629
        %v956 = vunpack.c.h.b16 %v629
        %v957 = vunpack.c.l.b16 %v630
        %v958 = vunpack.c.h.b16 %v630
        %v959 = vunpack.c.l.b16 %v631
        %v960 = vunpack.c.l.b16 %v632
        %v961 = vunpack.c.h.b16 %v632
        %v962 = vunpack.c.l.b16 %v633
        %v963 = vunpack.c.h.b16 %v633
        %v964 = vunpack.c.l.b16 %v634
        %v965 = vunpack.c.l.b16 %v635
        %v966 = vunpack.c.h.b16 %v635
        %v967 = vunpack.c.l.b16 %v636
        %v968 = vunpack.c.h.b16 %v636
        %v969 = vunpack.c.l.b16 %v637
        %v970 = vunpack.c.l.b16 %v638
        %v971 = vunpack.c.h.b16 %v638
        %v972 = vunpack.c.l.b16 %v639
        %v973 = vunpack.c.h.b16 %v639
        %v974 = vunpack.c.l.b16 %v640
        %v975 = vunpack.c.l.b16 %v641
        %v976 = vunpack.c.h.b16 %v641
        %v977 = vunpack.c.l.b16 %v642
        %v978 = vunpack.c.h.b16 %v642
        %v979 = vunpack.c.l.b16 %v643
        %v980 = vunpack.c.l.b16 %v644
        %v981 = vunpack.c.h.b16 %v644
        %v982 = vunpack.c.l.b16 %v645
        %v983 = vunpack.c.h.b16 %v645
        %v984 = vunpack.c.l.b16 %v646
        %v985 = vunpack.c.l.b16 %v647
        %v986 = vunpack.c.h.b16 %v647
        %v987 = vunpack.c.l.b16 %v648
        %v988 = vunpack.c.h.b16 %v648
        %v989 = vunpack.c.l.b16 %v649
        %v990 = vunpack.c.l.b16 %v650
        %v991 = vunpack.c.h.b16 %v650
        %v992 = vunpack.c.l.b16 %v651
        %v993 = vunpack.c.h.b16 %v651
        %v994 = vunpack.c.l.b16 %v652
        %v995 = vunpack.c.l.b16 %v653
        %v996 = vunpack.c.h.b16 %v653
        %v997 = vunpack.c.l.b16 %v654
        %v998 = vunpack.c.h.b16 %v654
        %v999 = vunpack.c.l.b16 %v655
        %v1000 = vunpack.c.l.b16 %v656
        %v1001 = vunpack.c.h.b16 %v656
        %v1002 = vunpack.c.l.b16 %v657
        %v1003 = vunpack.c.h.b16 %v657
        %v1004 = vunpack.c.l.b16 %v658
        %v1005 = vunpack.c.l.b16 %v659
        %v1006 = vunpack.c.h.b16 %v659
        %v1007 = vunpack.c.l.b16 %v660
        %v1008 = vunpack.c.h.b16 %v660
        %v1009 = vunpack.c.l.b16 %v661
        %v1010 = vunpack.c.l.b16 %v662
        %v1011 = vunpack.c.h.b16 %v662
        %v1012 = vunpack.c.l.b16 %v663
        %v1013 = vunpack.c.h.b16 %v663
        %v1014 = vunpack.c.l.b16 %v664
        %v1015 = vunpack.c.l.b16 %v665
        %v1016 = vunpack.c.h.b16 %v665
        %v1017 = vunpack.c.l.b16 %v666
        %v1018 = vunpack.c.h.b16 %v666
        %v1019 = vunpack.c.l.b16 %v667
        %v1020 = vunpack.c.l.b16 %v668
        %v1021 = vunpack.c.h.b16 %v668
        %v1022 = vunpack.c.l.b16 %v669
        %v1023 = vunpack.c.h.b16 %v669
        %v1024 = vunpack.c.l.b16 %v670
        %v1025 = vunpack.c.l.b16 %v671
        %v1026 = vunpack.c.h.b16 %v671
        %v1027 = vunpack.c.l.b16 %v672
        %v1028 = vunpack.c.h.b16 %v672
        %v1029 = vunpack.c.l.b16 %v673
        %v1030 = vunpack.c.l.b16 %v674
        %v1031 = vunpack.c.h.b16 %v674
        %v1032 = vunpack.c.l.b16 %v675
        %v1033 = vunpack.c.h.b16 %v675
        %v1034 = vunpack.c.l.b16 %v676
        %v1035 = vunpack.c.l.b16 %v677
        %v1036 = vunpack.c.h.b16 %v677
        %v1037 = vunpack.c.l.b16 %v678
        %v1038 = vunpack.c.h.b16 %v678
        %v1039 = vunpack.c.l.b16 %v679
        %v1040 = vunpack.c.l.b16 %v680
        %v1041 = vunpack.c.h.b16 %v680
        %v1042 = vunpack.c.l.b16 %v681
        %v1043 = vunpack.c.h.b16 %v681
        %v1044 = vunpack.c.l.b16 %v682
        %v1045 = vunpack.c.l.b16 %v683
        %v1046 = vunpack.c.h.b16 %v683
        %v1047 = vunpack.c.l.b16 %v684
        %v1048 = vunpack.c.h.b16 %v684
        %v1049 = vunpack.c.l.b16 %v685
        %v1050 = vunpack.c.l.b16 %v686
        %v1051 = vunpack.c.h.b16 %v686
        %v1052 = vunpack.c.l.b16 %v687
        %v1053 = vunpack.c.h.b16 %v687
        %v1054 = vunpack.c.l.b16 %v688
        %v1055 = vunpack.c.l.b16 %v689
        %v1056 = vunpack.c.h.b16 %v689
        %v1057 = vunpack.c.l.b16 %v690
        %v1058 = vunpack.c.h.b16 %v690
        %v1059 = vunpack.c.l.b16 %v691
        %v1060 = vunpack.c.l.b16 %v692
        %v1061 = vunpack.c.h.b16 %v692
        %v1062 = vunpack.c.l.b16 %v693
        %v1063 = vunpack.c.h.b16 %v693
        %v1064 = vunpack.c.l.b16 %v694
        %v1065 = vunpack.c.l.b16 %v695
        %v1066 = vunpack.c.h.b16 %v695
        %v1067 = vunpack.c.l.b16 %v696
        %v1068 = vunpack.c.h.b16 %v696
        %v1069 = vunpack.c.l.b16 %v697
        %v1070 = vunpack.c.l.b16 %v698
        %v1071 = vunpack.c.h.b16 %v698
        %v1072 = vunpack.c.l.b16 %v699
        %v1073 = vunpack.c.h.b16 %v699
        %v1074 = vunpack.c.l.b16 %v700
        %v1075 = vunpack.c.l.b16 %v701
        %v1076 = vunpack.c.h.b16 %v701
        %v1077 = vunpack.c.l.b16 %v702
        %v1078 = vunpack.c.h.b16 %v702
        %v1079 = vunpack.c.l.b16 %v703
        %v1080 = vunpack.c.l.b16 %v704
        %v1081 = vunpack.c.h.b16 %v704
        %v1082 = vunpack.c.l.b16 %v705
        %v1083 = vunpack.c.h.b16 %v705
        %v1084 = vunpack.c.l.b16 %v706
        %v1085 = vunpack.c.l.b16 %v707
        %v1086 = vunpack.c.h.b16 %v707
        %v1087 = vunpack.c.l.b16 %v708
        %v1088 = vunpack.c.h.b16 %v708
        %v1089 = vunpack.c.l.b16 %v709
        %v1090 = vunpack.c.l.b16 %v710
        %v1091 = vunpack.c.h.b16 %v710
        %v1092 = vunpack.c.l.b16 %v711
        %v1093 = vunpack.c.h.b16 %v711
        %v1094 = vunpack.c.l.b16 %v712
        %v1095 = vunpack.c.l.b16 %v713
        %v1096 = vunpack.c.h.b16 %v713
        %v1097 = vunpack.c.l.b16 %v714
        %v1098 = vunpack.c.h.b16 %v714
        %v1099 = vunpack.c.l.b16 %v715
        %v1100 = vpack.c.b16 %v865, %v860
        %v1101 = vpack.c.b16 %v866, %v861
        %v1102 = vpack.c.b16 %v867, %v862
        %v1103 = vpack.c.b16 %v868, %v863
        %v1104 = vpack.c.b16 %v869, %v864
        %v1105 = vpack.c.b16 %v875, %v870
        %v1106 = vpack.c.b16 %v876, %v871
        %v1107 = vpack.c.b16 %v877, %v872
        %v1108 = vpack.c.b16 %v878, %v873
        %v1109 = vpack.c.b16 %v879, %v874
        %v1110 = vpack.c.b16 %v885, %v880
        %v1111 = vpack.c.b16 %v886, %v881
        %v1112 = vpack.c.b16 %v887, %v882
        %v1113 = vpack.c.b16 %v888, %v883
        %v1114 = vpack.c.b16 %v889, %v884
        %v1115 = vpack.c.b16 %v895, %v890
        %v1116 = vpack.c.b16 %v896, %v891
        %v1117 = vpack.c.b16 %v897, %v892
        %v1118 = vpack.c.b16 %v898, %v893
        %v1119 = vpack.c.b16 %v899, %v894
        %v1120 = vpack.c.b16 %v905, %v900
        %v1121 = vpack.c.b16 %v906, %v901
        %v1122 = vpack.c.b16 %v907, %v902
        %v1123 = vpack.c.b16 %v908, %v903
        %v1124 = vpack.c.b16 %v909, %v904
        %v1125 = vpack.c.b16 %v915, %v910
        %v1126 = vpack.c.b16 %v916, %v911
        %v1127 = vpack.c.b16 %v917, %v912
        %v1128 = vpack.c.b16 %v918, %v913
        %v1129 = vpack.c.b16 %v919, %v914
        %v1130 = vpack.c.b16 %v925, %v920
        %v1131 = vpack.c.b16 %v926, %v921
        %v1132 = vpack.c.b16 %v927, %v922
        %v1133 = vpack.c.b16 %v928, %v923
        %v1134 = vpack.c.b16 %v929, %v924
        %v1135 = vpack.c.b16 %v935, %v930
        %v1136 = vpack.c.b16 %v936, %v931
        %v1137 = vpack.c.b16 %v937, %v932
        %v1138 = vpack.c.b16 %v938, %v933
        %v1139 = vpack.c.b16 %v939, %v934
        %v1140 = vpack.c.b16 %v945, %v940
        %v1141 = vpack.c.b16 %v946, %v941
        %v1142 = vpack.c.b16 %v947, %v942
        %v1143 = vpack.c.b16 %v948, %v943
        %v1144 = vpack.c.b16 %v949, %v944
        %v1145 = vpack.c.b16 %v955, %v950
        %v1146 = vpack.c.b16 %v956, %v951
        %v1147 = vpack.c.b16 %v957, %v952
        %v1148 = vpack.c.b16 %v958, %v953
        %v1149 = vpack.c.b16 %v959, %v954
        %v1150 = vpack.c.b16 %v965, %v960
        %v1151 = vpack.c.b16 %v966, %v961
        %v1152 = vpack.c.b16 %v967, %v962
        %v1153 = vpack.c.b16 %v968, %v963
        %v1154 = vpack.c.b16 %v969, %v964
        %v1155 = vpack.c.b16 %v975, %v970
        %v1156 = vpack.c.b16 %v976, %v971
        %v1157 = vpack.c.b16 %v977, %v972
        %v1158 = vpack.c.b16 %v978, %v973
        %v1159 = vpack.c.b16 %v979, %v974
        %v1160 = vpack.c.b16 %v985, %v980
        %v1161 = vpack.c.b16 %v986, %v981
        %v1162 = vpack.c.b16 %v987, %v982
        %v1163 = vpack.c.b16 %v988, %v983
        %v1164 = vpack.c.b16 %v989, %v984
        %v1165 = vpack.c.b16 %v995, %v990
        %v1166 = vpack.c.b16 %v996, %v991
        %v1167 = vpack.c.b16 %v997, %v992
        %v1168 = vpack.c.b16 %v998, %v993
        %v1169 = vpack.c.b16 %v999, %v994
        %v1170 = vpack.c.b16 %v1005, %v1000
        %v1171 = vpack.c.b16 %v1006, %v1001
        %v1172 = vpack.c.b16 %v1007, %v1002
        %v1173 = vpack.c.b16 %v1008, %v1003
        %v1174 = vpack.c.b16 %v1009, %v1004
        %v1175 = vpack.c.b16 %v1015, %v1010
        %v1176 = vpack.c.b16 %v1016, %v1011
        %v1177 = vpack.c.b16 %v1017, %v1012
        %v1178 = vpack.c.b16 %v1018, %v1013
        %v1179 = vpack.c.b16 %v1019, %v1014
        %v1180 = vpack.c.b16 %v1025, %v1020
        %v1181 = vpack.c.b16 %v1026, %v1021
        %v1182 = vpack.c.b16 %v1027, %v1022
        %v1183 = vpack.c.b16 %v1028, %v1023
        %v1184 = vpack.c.b16 %v1029, %v1024
        %v1185 = vpack.c.b16 %v1035, %v1030
        %v1186 = vpack.c.b16 %v1036, %v1031
        %v1187 = vpack.c.b16 %v1037, %v1032
        %v1188 = vpack.c.b16 %v1038, %v1033
        %v1189 = vpack.c.b16 %v1039, %v1034
        %v1190 = vpack.c.b16 %v1045, %v1040
        %v1191 = vpack.c.b16 %v1046, %v1041
        %v1192 = vpack.c.b16 %v1047, %v1042
        %v1193 = vpack.c.b16 %v1048, %v1043
        %v1194 = vpack.c.b16 %v1049, %v1044
        %v1195 = vpack.c.b16 %v1055, %v1050
        %v1196 = vpack.c.b16 %v1056, %v1051
        %v1197 = vpack.c.b16 %v1057, %v1052
        %v1198 = vpack.c.b16 %v1058, %v1053
        %v1199 = vpack.c.b16 %v1059, %v1054
        %v1200 = vpack.c.b16 %v1065, %v1060
        %v1201 = vpack.c.b16 %v1066, %v1061
        %v1202 = vpack.c.b16 %v1067, %v1062
        %v1203 = vpack.c.b16 %v1068, %v1063
        %v1204 = vpack.c.b16 %v1069, %v1064
        %v1205 = vpack.c.b16 %v1075, %v1070
        %v1206 = vpack.c.b16 %v1076, %v1071
        %v1207 = vpack.c.b16 %v1077, %v1072
        %v1208 = vpack.c.b16 %v1078, %v1073
        %v1209 = vpack.c.b16 %v1079, %v1074
        %v1210 = vpack.c.b16 %v1085, %v1080
        %v1211 = vpack.c.b16 %v1086, %v1081
        %v1212 = vpack.c.b16 %v1087, %v1082
        %v1213 = vpack.c.b16 %v1088, %v1083
        %v1214 = vpack.c.b16 %v1089, %v1084
        %v1215 = vpack.c.b16 %v1095, %v1090
        %v1216 = vpack.c.b16 %v1096, %v1091
        %v1217 = vpack.c.b16 %v1097, %v1092
        %v1218 = vpack.c.b16 %v1098, %v1093
        %v1219 = vpack.c.b16 %v1099, %v1094
        %1340 = vmatprep.subr.bf16.mxu0 %v1101
        %1341 = vmatpush1.bf16.msra.mxu0 %v1100
        %1342 = vmatprep.subr.bf16.mxu0 %v1106
        %1343 = vmatpush1.bf16.msra.mxu0 %v1105
        %1344 = vmatprep.subr.bf16.mxu0 %v1111
        %1345 = vmatpush1.bf16.msra.mxu0 %v1110
        %1346 = vmatprep.subr.bf16.mxu0 %v1116
        %1347 = vmatpush1.bf16.msra.mxu0 %v1115
        %1348 = vmatprep.subr.bf16.mxu0 %v1121
        %1349 = vmatpush1.bf16.msra.mxu0 %v1120
        %1350 = vmatprep.subr.bf16.mxu0 %v1126
        %1351 = vmatpush1.bf16.msra.mxu0 %v1125
        %1352 = vmatprep.subr.bf16.mxu0 %v1131
        %1353 = vmatpush1.bf16.msra.mxu0 %v1130
        %1354 = vmatprep.subr.bf16.mxu0 %v1136
        %1355 = vmatpush1.bf16.msra.mxu0 %v1135
        %1356 = vmatprep.subr.bf16.mxu0 %v1141
        %1357 = vmatpush1.bf16.msra.mxu0 %v1140
        %1358 = vmatprep.subr.bf16.mxu0 %v1146
        %1359 = vmatpush1.bf16.msra.mxu0 %v1145
        %1360 = vmatprep.subr.bf16.mxu0 %v1151
        %1361 = vmatpush1.bf16.msra.mxu0 %v1150
        %1362 = vmatprep.subr.bf16.mxu0 %v1156
        %1363 = vmatpush1.bf16.msra.mxu0 %v1155
        %1364 = vmatprep.subr.bf16.mxu0 %v1161
        %1365 = vmatpush1.bf16.msra.mxu0 %v1160
        %1366 = vmatprep.subr.bf16.mxu0 %v1166
        %1367 = vmatpush1.bf16.msra.mxu0 %v1165
        %1368 = vmatprep.subr.bf16.mxu0 %v1171
        %1369 = vmatpush1.bf16.msra.mxu0 %v1170
        %1370 = vmatprep.subr.bf16.mxu0 %v1176
        %1371 = vmatpush1.bf16.msra.mxu0 %v1175
        %1372 = vmatprep.mubr.bf16.mxu0 %v570
        %1373 = vmatmul.mubr.bf16.gmra.mrb[0].mxu0 %v569
        %v1374 = vpop.f32.mrb[0].mxu0
        %v1375 = vadd.f32 0.0, %v1374
        %v1376 = vpop.f32.mrb[0].mxu0
        %v1377 = vadd.f32 0.0, %v1376
        %v1378 = vpop.f32.mrb[0].mxu0
        %v1379 = vadd.f32 0.0, %v1378
        %v1380 = vpop.f32.mrb[0].mxu0
        %v1381 = vadd.f32 0.0, %v1380
        %1382 = vdwg.mxu0
        %1383 = vmatprep.subr.bf16.mxu0 %v1181
        %1384 = vmatpush1.bf16.msra.mxu0 %v1180
        %1385 = vmatprep.subr.bf16.mxu0 %v1186
        %1386 = vmatpush1.bf16.msra.mxu0 %v1185
        %1387 = vmatprep.subr.bf16.mxu0 %v1191
        %1388 = vmatpush1.bf16.msra.mxu0 %v1190
        %1389 = vmatprep.subr.bf16.mxu0 %v1196
        %1390 = vmatpush1.bf16.msra.mxu0 %v1195
        %1391 = vmatprep.subr.bf16.mxu0 %v1201
        %1392 = vmatpush1.bf16.msra.mxu0 %v1200
        %1393 = vmatprep.subr.bf16.mxu0 %v1206
        %1394 = vmatpush1.bf16.msra.mxu0 %v1205
        %1395 = vmatprep.subr.bf16.mxu0 %v1211
        %1396 = vmatpush1.bf16.msra.mxu0 %v1210
        %1397 = vmatprep.subr.bf16.mxu0 %v1216
        %1398 = vmatpush1.bf16.msra.mxu0 %v1215
        %1399 = vmatprep.subr.bf16.mxu0 0
        %1400 = vmatpush1.bf16.msra.mxu0 0
        %1401 = vmatprep.subr.bf16.mxu0 0
        %1402 = vmatpush1.bf16.msra.mxu0 0
        %1403 = vmatprep.subr.bf16.mxu0 0
        %1404 = vmatpush1.bf16.msra.mxu0 0
        %1405 = vmatprep.subr.bf16.mxu0 0
        %1406 = vmatpush1.bf16.msra.mxu0 0
        %1407 = vmatprep.subr.bf16.mxu0 0
        %1408 = vmatpush1.bf16.msra.mxu0 0
        %1409 = vmatprep.subr.bf16.mxu0 0
        %1410 = vmatpush1.bf16.msra.mxu0 0
        %1411 = vmatprep.subr.bf16.mxu0 0
        %1412 = vmatpush1.bf16.msra.mxu0 0
        %1413 = vmatprep.subr.bf16.mxu0 0
        %1414 = vmatpush1.bf16.msra.mxu0 0
        %1415 = vmatprep.mubr.bf16.mxu0 0
        %1416 = vmatmul.mubr.bf16.gmra.mrb[0].mxu0 %v571
        %v1417 = vpop.f32.mrb[0].mxu0
        %v1418 = vadd.f32 %v1375, %v1417
        %v1419 = vpop.f32.mrb[0].mxu0
        %v1420 = vadd.f32 %v1377, %v1419
        %v1421 = vpop.f32.mrb[0].mxu0
        %v1422 = vadd.f32 %v1379, %v1421
        %v1423 = vpop.f32.mrb[0].mxu0
        %v1424 = vadd.f32 %v1381, %v1423
        %1425 = vdwg.mxu0
        %1426 = vmatprep.subr.bf16.mxu0 %v1103
        %1427 = vmatpush1.bf16.msra.mxu0 %v1102
        %1428 = vmatprep.subr.bf16.mxu0 %v1108
        %1429 = vmatpush1.bf16.msra.mxu0 %v1107
        %1430 = vmatprep.subr.bf16.mxu0 %v1113
        %1431 = vmatpush1.bf16.msra.mxu0 %v1112
        %1432 = vmatprep.subr.bf16.mxu0 %v1118
        %1433 = vmatpush1.bf16.msra.mxu0 %v1117
        %1434 = vmatprep.subr.bf16.mxu0 %v1123
        %1435 = vmatpush1.bf16.msra.mxu0 %v1122
        %1436 = vmatprep.subr.bf16.mxu0 %v1128
        %1437 = vmatpush1.bf16.msra.mxu0 %v1127
        %1438 = vmatprep.subr.bf16.mxu0 %v1133
        %1439 = vmatpush1.bf16.msra.mxu0 %v1132
        %1440 = vmatprep.subr.bf16.mxu0 %v1138
        %1441 = vmatpush1.bf16.msra.mxu0 %v1137
        %1442 = vmatprep.subr.bf16.mxu0 %v1143
        %1443 = vmatpush1.bf16.msra.mxu0 %v1142
        %1444 = vmatprep.subr.bf16.mxu0 %v1148
        %1445 = vmatpush1.bf16.msra.mxu0 %v1147
        %1446 = vmatprep.subr.bf16.mxu0 %v1153
        %1447 = vmatpush1.bf16.msra.mxu0 %v1152
        %1448 = vmatprep.subr.bf16.mxu0 %v1158
        %1449 = vmatpush1.bf16.msra.mxu0 %v1157
        %1450 = vmatprep.subr.bf16.mxu0 %v1163
        %1451 = vmatpush1.bf16.msra.mxu0 %v1162
        %1452 = vmatprep.subr.bf16.mxu0 %v1168
        %1453 = vmatpush1.bf16.msra.mxu0 %v1167
        %1454 = vmatprep.subr.bf16.mxu0 %v1173
        %1455 = vmatpush1.bf16.msra.mxu0 %v1172
        %1456 = vmatprep.subr.bf16.mxu0 %v1178
        %1457 = vmatpush1.bf16.msra.mxu0 %v1177
        %1458 = vmatprep.mubr.bf16.mxu0 %v570
        %1459 = vmatmul.mubr.bf16.gmra.mrb[0].mxu0 %v569
        %v1460 = vpop.f32.mrb[0].mxu0
        %v1461 = vadd.f32 0.0, %v1460
        %v1462 = vpop.f32.mrb[0].mxu0
        %v1463 = vadd.f32 0.0, %v1462
        %v1464 = vpop.f32.mrb[0].mxu0
        %v1465 = vadd.f32 0.0, %v1464
        %v1466 = vpop.f32.mrb[0].mxu0
        %v1467 = vadd.f32 0.0, %v1466
        %1468 = vdwg.mxu0
        %1469 = vmatprep.subr.bf16.mxu0 %v1183
        %1470 = vmatpush1.bf16.msra.mxu0 %v1182
        %1471 = vmatprep.subr.bf16.mxu0 %v1188
        %1472 = vmatpush1.bf16.msra.mxu0 %v1187
        %1473 = vmatprep.subr.bf16.mxu0 %v1193
        %1474 = vmatpush1.bf16.msra.mxu0 %v1192
        %1475 = vmatprep.subr.bf16.mxu0 %v1198
        %1476 = vmatpush1.bf16.msra.mxu0 %v1197
        %1477 = vmatprep.subr.bf16.mxu0 %v1203
        %1478 = vmatpush1.bf16.msra.mxu0 %v1202
        %1479 = vmatprep.subr.bf16.mxu0 %v1208
        %1480 = vmatpush1.bf16.msra.mxu0 %v1207
        %1481 = vmatprep.subr.bf16.mxu0 %v1213
        %1482 = vmatpush1.bf16.msra.mxu0 %v1212
        %1483 = vmatprep.subr.bf16.mxu0 %v1218
        %1484 = vmatpush1.bf16.msra.mxu0 %v1217
        %1485 = vmatprep.subr.bf16.mxu0 0
        %1486 = vmatpush1.bf16.msra.mxu0 0
        %1487 = vmatprep.subr.bf16.mxu0 0
        %1488 = vmatpush1.bf16.msra.mxu0 0
        %1489 = vmatprep.subr.bf16.mxu0 0
        %1490 = vmatpush1.bf16.msra.mxu0 0
        %1491 = vmatprep.subr.bf16.mxu0 0
        %1492 = vmatpush1.bf16.msra.mxu0 0
        %1493 = vmatprep.subr.bf16.mxu0 0
        %1494 = vmatpush1.bf16.msra.mxu0 0
        %1495 = vmatprep.subr.bf16.mxu0 0
        %1496 = vmatpush1.bf16.msra.mxu0 0
        %1497 = vmatprep.subr.bf16.mxu0 0
        %1498 = vmatpush1.bf16.msra.mxu0 0
        %1499 = vmatprep.subr.bf16.mxu0 0
        %1500 = vmatpush1.bf16.msra.mxu0 0
        %1501 = vmatprep.mubr.bf16.mxu0 0
        %1502 = vmatmul.mubr.bf16.gmra.mrb[0].mxu0 %v571
        %v1503 = vpop.f32.mrb[0].mxu0
        %v1504 = vadd.f32 %v1461, %v1503
        %v1505 = vpop.f32.mrb[0].mxu0
        %v1506 = vadd.f32 %v1463, %v1505
        %v1507 = vpop.f32.mrb[0].mxu0
        %v1508 = vadd.f32 %v1465, %v1507
        %v1509 = vpop.f32.mrb[0].mxu0
        %v1510 = vadd.f32 %v1467, %v1509
        %1511 = vdwg.mxu0
        %1512 = vmatprep.subr.bf16.mxu0 0
        %1513 = vmatpush1.bf16.msra.mxu0 %v1104
        %1514 = vmatprep.subr.bf16.mxu0 0
        %1515 = vmatpush1.bf16.msra.mxu0 %v1109
        %1516 = vmatprep.subr.bf16.mxu0 0
        %1517 = vmatpush1.bf16.msra.mxu0 %v1114
        %1518 = vmatprep.subr.bf16.mxu0 0
        %1519 = vmatpush1.bf16.msra.mxu0 %v1119
        %1520 = vmatprep.subr.bf16.mxu0 0
        %1521 = vmatpush1.bf16.msra.mxu0 %v1124
        %1522 = vmatprep.subr.bf16.mxu0 0
        %1523 = vmatpush1.bf16.msra.mxu0 %v1129
        %1524 = vmatprep.subr.bf16.mxu0 0
        %1525 = vmatpush1.bf16.msra.mxu0 %v1134
        %1526 = vmatprep.subr.bf16.mxu0 0
        %1527 = vmatpush1.bf16.msra.mxu0 %v1139
        %1528 = vmatprep.subr.bf16.mxu0 0
        %1529 = vmatpush1.bf16.msra.mxu0 %v1144
        %1530 = vmatprep.subr.bf16.mxu0 0
        %1531 = vmatpush1.bf16.msra.mxu0 %v1149
        %1532 = vmatprep.subr.bf16.mxu0 0
        %1533 = vmatpush1.bf16.msra.mxu0 %v1154
        %1534 = vmatprep.subr.bf16.mxu0 0
        %1535 = vmatpush1.bf16.msra.mxu0 %v1159
        %1536 = vmatprep.subr.bf16.mxu0 0
        %1537 = vmatpush1.bf16.msra.mxu0 %v1164
        %1538 = vmatprep.subr.bf16.mxu0 0
        %1539 = vmatpush1.bf16.msra.mxu0 %v1169
        %1540 = vmatprep.subr.bf16.mxu0 0
        %1541 = vmatpush1.bf16.msra.mxu0 %v1174
        %1542 = vmatprep.subr.bf16.mxu0 0
        %1543 = vmatpush1.bf16.msra.mxu0 %v1179
        %1544 = vmatprep.mubr.bf16.mxu0 %v570
        %1545 = vmatmul.mubr.bf16.gmra.mrb[0].mxu0 %v569
        %v1546 = vpop.f32.mrb[0].mxu0
        %v1547 = vadd.f32 0.0, %v1546
        %v1548 = vpop.f32.mrb[0].mxu0
        %v1549 = vpop.f32.mrb[0].mxu0
        %v1550 = vadd.f32 0.0, %v1549
        %v1551 = vpop.f32.mrb[0].mxu0
        %1552 = vdwg.mxu0
        %1553 = vmatprep.subr.bf16.mxu0 0
        %1554 = vmatpush1.bf16.msra.mxu0 %v1184
        %1555 = vmatprep.subr.bf16.mxu0 0
        %1556 = vmatpush1.bf16.msra.mxu0 %v1189
        %1557 = vmatprep.subr.bf16.mxu0 0
        %1558 = vmatpush1.bf16.msra.mxu0 %v1194
        %1559 = vmatprep.subr.bf16.mxu0 0
        %1560 = vmatpush1.bf16.msra.mxu0 %v1199
        %1561 = vmatprep.subr.bf16.mxu0 0
        %1562 = vmatpush1.bf16.msra.mxu0 %v1204
        %1563 = vmatprep.subr.bf16.mxu0 0
        %1564 = vmatpush1.bf16.msra.mxu0 %v1209
        %1565 = vmatprep.subr.bf16.mxu0 0
        %1566 = vmatpush1.bf16.msra.mxu0 %v1214
        %1567 = vmatprep.subr.bf16.mxu0 0
        %1568 = vmatpush1.bf16.msra.mxu0 %v1219
        %1569 = vmatprep.subr.bf16.mxu0 0
        %1570 = vmatpush1.bf16.msra.mxu0 0
        %1571 = vmatprep.subr.bf16.mxu0 0
        %1572 = vmatpush1.bf16.msra.mxu0 0
        %1573 = vmatprep.subr.bf16.mxu0 0
        %1574 = vmatpush1.bf16.msra.mxu0 0
        %1575 = vmatprep.subr.bf16.mxu0 0
        %1576 = vmatpush1.bf16.msra.mxu0 0
        %1577 = vmatprep.subr.bf16.mxu0 0
        %1578 = vmatpush1.bf16.msra.mxu0 0
        %1579 = vmatprep.subr.bf16.mxu0 0
        %1580 = vmatpush1.bf16.msra.mxu0 0
        %1581 = vmatprep.subr.bf16.mxu0 0
        %1582 = vmatpush1.bf16.msra.mxu0 0
        %1583 = vmatprep.subr.bf16.mxu0 0
        %1584 = vmatpush1.bf16.msra.mxu0 0
        %1585 = vmatprep.mubr.bf16.mxu0 0
        %1586 = vmatmul.mubr.bf16.gmra.mrb[0].mxu0 %v571
        %v1587 = vpop.f32.mrb[0].mxu0
        %v1588 = vadd.f32 %v1547, %v1587
        %v1589 = vpop.f32.mrb[0].mxu0
        %v1590 = vpop.f32.mrb[0].mxu0
        %v1591 = vadd.f32 %v1550, %v1590
        %v1592 = vpop.f32.mrb[0].mxu0
        %1593 = vdwg.mxu0
        %v1594 = vmul.f32 %v1418, 1.442695
        %v1595 = vpow.pop %v1594
        %v1596 = vmul.f32 %v1420, 1.442695
        %v1597 = vpow.pop %v1596
        %v1598 = vmul.f32 %v1504, 1.442695
        %v1599 = vpow.pop %v1598
        %v1600 = vmul.f32 %v1506, 1.442695
        %v1601 = vpow.pop %v1600
        %v1602 = vmul.f32 %v1588, 1.442695
        %v1603 = vpow.pop %v1602
        %v1604 = vmul.f32 %v1422, 1.442695
        %v1605 = vpow.pop %v1604
        %v1606 = vmul.f32 %v1424, 1.442695
        %v1607 = vpow.pop %v1606
        %v1608 = vmul.f32 %v1508, 1.442695
        %v1609 = vpow.pop %v1608
        %v1610 = vmul.f32 %v1510, 1.442695
        %v1611 = vpow.pop %v1610
        %v1612 = vmul.f32 %v1591, 1.442695
        %v1613 = vpow.pop %v1612
        %1614 = vst [vmem:[%s204] sm:$0xff] %v1595
        %1615 = vst [vmem:[%s204 + $0x8] sm:$0xff] %v1597
        %1616 = vst [vmem:[%s204 + $0x10] sm:$0xff] %v1599
        %1617 = vst [vmem:[%s204 + $0x18] sm:$0xff] %v1601
        %1618 = vst [vmem:[%s204 + $0x20] sm:$0xff] %v1603
        %1619 = vst [vmem:[%s204 + $0x28] sm:$0xff] %v1605
        %1620 = vst [vmem:[%s204 + $0x30] sm:$0xff] %v1607
        %1621 = vst [vmem:[%s204 + $0x38] sm:$0xff] %v1609
        %1622 = vst [vmem:[%s204 + $0x40] sm:$0xff] %v1611
        %1623 = vst [vmem:[%s204 + $0x48] sm:$0xff] %v1613
        %s1624 = smul.u32 2, %s16
        %p1625 = scmp.lt.s32.totalorder %s1624, 3
        %s1626 = scalar_select %p1625, %s1624, 3
        %s1627 = smul.addr %s1626, 5
        %s1628 = smul.addr %s1627, 8
        %s1629 = scalar_lea.vmem %s3, %s1628
        // Predicated region
        $region41: #{_stc_forward.1} parent=31 // pred_check
          %p1630 = pneg %p102
        $region42: #{_stc_forward.1} parent=31 // pred_check_branch
          %1632 = sbr.rel (%p1630) target = $region44
        $region43: #{_stc_forward.1} parent=31 // pred_region
          %s1633 = smul.u32 2, %s16
        $region44: #{_stc_forward.1} parent=31 // pred_fallthru
          _
      $region32: #{_stc_forward.1} parent=5 // pred_fallthru
        _
      %p1634 = scmp.le.s32.totalorder 2, %s11
      // Predicated region
      $region45: #{_stc_forward.1} parent=5 // pred_check
        %p1635 = pneg %p1634
      $region46: #{_stc_forward.1} parent=5 // pred_check_branch
        %1637 = sbr.rel (%p1635) target = $region48
      $region47: #{_stc_forward.1} parent=5 // pred_region
        %s1638 = ssub.s32 %s11, 2
        // Predicated region
        $region49: #{_stc_forward.1} parent=47 // pred_check
          %p1639 = pneg %p108
        $region50: #{_stc_forward.1} parent=47 // pred_check_branch
          %1641 = sbr.rel (%p1639) target = $region52
        $region51: #{_stc_forward.1} parent=47 // pred_region
          %s1642 = smul.u32 2, %s17
          %p1643 = scmp.lt.s32.totalorder %s1642, 3
          %s1644 = scalar_select %p1643, %s1642, 3
          %s1645 = smul.addr %s1644, 5
          %s1646 = smul.addr %s1645, 8
          %s1647 = scalar_lea.vmem %s3, %s1646
        $region52: #{_stc_forward.1} parent=47 // pred_fallthru
          _
      $region48: #{_stc_forward.1} parent=5 // pred_fallthru
        _
    $region6: #{_stc_forward.1} parent=1 // loop_footer
      %s15 = sadd.s32 1, %s11
    $region7: #{_stc_forward.1} parent=1 // loop_footer_branch
      %10 = sbr.rel target = $region3
    $region8: #{_stc_forward.1} parent=1 // loop_exit
      _
    %1648 = vsyncpa [#allocation3], 1
    %s1649 = scalar_lea.sflag [#allocation3], 1
    %1650 = vsyncpa %s1649, 1
    %1651 = vsyncpa [#allocation5], 1

</llo_original>
